<compile_context>
chip_gen: v7x
topology: tpu7x:2x2x1
jax: 0.10.0
libtpu: 0.0.40
codegen_flags: <defaults>
</compile_context>

<pallas_src>
import functools

import jax
import jax.numpy as jnp
from jax.experimental import pallas as pl
from jax.experimental.pallas import tpu as pltpu


def _round_up(x, m):
    return (x + m - 1) // m * m


def _bn_relu_conv3x3_kernel(x_ref, scale_ref, shift_ref, mask_ref, w_ref, o_ref,
                            *, wp, ltot, b_blk):
    """Fused (folded-stat) BatchNorm + ReLU + 3x3 same-conv for B_blk images.

    x_ref:     (B_blk, Cp, Ltot) f32  zero-padded input, spatial flat on lanes
    scale_ref: (Cp, 1)           f32  per-channel BN scale (gamma*rsqrt(var+eps))
    shift_ref: (Cp, 1)           f32  per-channel BN shift (beta - mean*scale)
    mask_ref:  (1, Ltot)         f32  1.0 on real pixels, 0.0 on halo/tail lanes
    w_ref:     (9, Co, Cp)       f32  conv weights, one (Co, Cp) slab per tap
    o_ref:     (B_blk, Co, Ltot) f32  conv output at padded-image flat positions
    """
    # Hoist the small shared operands out of the per-image loop.
    scale = scale_ref[...]                                        # (Cp, 1)
    shift = shift_ref[...]                                        # (Cp, 1)
    mask = mask_ref[...]                                          # (1, Ltot)
    w = w_ref[...]                                                # (9, Co, Cp)

    for b in range(b_blk):                                        # unrolled
        x = x_ref[b]                                              # (Cp, Ltot)

        # BatchNorm (batch stats folded into scale/shift) + ReLU in f32, then
        # zero the 1-px halo ring / lane tail so they act as conv zero-padding.
        y = jnp.maximum(x * scale + shift, 0.0) * mask             # (Cp, Ltot)

        # 3x3 conv as 9 accumulating MXU matmuls over lane-rolled views of y.
        # roll is circular, but the wrap only reaches output lanes that the
        # wrapper's final crop discards (asserted there).
        acc = None
        tap = 0
        for ky in range(3):
            for kx in range(3):
                t = (ky - 1) * wp + (kx - 1)          # tap lane offset
                yr = y if t == 0 else pltpu.roll(y, (-t) % ltot, axis=1)
                d = jnp.dot(w[tap], yr, preferred_element_type=jnp.float32)
                acc = d if acc is None else acc + d
                tap += 1
        o_ref[b] = acc                                            # (Co, Ltot)


def bn_relu_conv(x_nchw, gamma, beta, w_oihw, eps=1e-5):
    """BNReLUConv(dir=0) forward: NCHW in / NCHW out (PyTorch semantics)."""
    N, C, H, W = x_nchw.shape
    Co = w_oihw.shape[0]
    Hp, Wp = H + 2, W + 2
    Cp = _round_up(C, 8)                    # sublane-tile aligned channel count
    ltot = _round_up(Hp * Wp, 128)          # lane-dense flattened padded image

    # Layout invariants for the flattened-spatial / circular-roll im2col:
    assert Cp % 8 == 0 and ltot % 128 == 0 and ltot >= Hp * Wp
    # Valid (kept) outputs never read past the padded image, so the circular
    # wrap of pltpu.roll only pollutes outputs that the final crop discards.
    assert (H + 1) * Wp + (W + 1) < Hp * Wp <= ltot

    x = x_nchw.astype(jnp.float32)

    # ---- BN batch statistics (training-mode forward), folded to scale/shift.
    #      jnp.var is E[(x-mean)^2] (biased), so it is >= 0 (no rsqrt NaN).
    mean = jnp.mean(x, axis=(0, 2, 3))
    var = jnp.var(x, axis=(0, 2, 3))
    scale = gamma.astype(jnp.float32) * jax.lax.rsqrt(var + eps)
    shift = beta.astype(jnp.float32) - mean * scale
    scale = jnp.pad(scale, (0, Cp - C)).reshape(Cp, 1)
    shift = jnp.pad(shift, (0, Cp - C)).reshape(Cp, 1)

    # ---- (N, Cp, ltot) slab: channel pad + 1-px halo + flatten + lane tail,
    #      all constant pads so XLA fuses them into a single pass over x.
    xp = jnp.pad(x, ((0, 0), (0, Cp - C), (1, 1), (1, 1)))    # (N, Cp, Hp, Wp)
    slab = jnp.pad(xp.reshape(N, Cp, Hp * Wp),
                   ((0, 0), (0, 0), (0, ltot - Hp * Wp)))     # (N, Cp, ltot)

    # ---- 1.0 on real pixels, 0.0 on halo ring / lane tail.
    inner = jnp.pad(jnp.ones((H, W), jnp.float32), ((1, 1), (1, 1))).reshape(-1)
    mask = jnp.pad(inner, (0, ltot - Hp * Wp)).reshape(1, ltot)

    # ---- weights OIHW -> per-tap (9, Co, Cp) slabs, kept in f32 (the MXU is
    #      idle at these shapes; skipping the bf16 pack saves VPU work and
    #      improves accuracy).
    wpad = jnp.pad(w_oihw.astype(jnp.float32),
                   ((0, 0), (0, Cp - C), (0, 0), (0, 0)))     # (Co, Cp, 3, 3)
    w_taps = jnp.transpose(wpad, (2, 3, 0, 1)).reshape(9, Co, Cp)

    # ---- grid policy: keep 2 parallel steps when possible (v7x has 2 TCs and
    #      shards the "parallel" axis across them); on single-TC v5e/v6e this
    #      costs at most one extra ~0.35us grid step.
    steps = 2 if (N >= 2 and N % 2 == 0) else N
    b_blk = N // steps

    kernel = functools.partial(_bn_relu_conv3x3_kernel,
                               wp=Wp, ltot=ltot, b_blk=b_blk)

    flops = 2 * N * Co * 9 * Cp * ltot + 4 * N * Cp * ltot
    bytes_accessed = (N * Cp * ltot * 4 + 9 * Co * Cp * 4 + ltot * 4
                      + 2 * Cp * 4 + N * Co * ltot * 4)

    out_flat = pl.pallas_call(
        kernel,
        out_shape=jax.ShapeDtypeStruct((N, Co, ltot), jnp.float32),
        grid=(steps,),
        in_specs=[
            pl.BlockSpec((b_blk, Cp, ltot), lambda n: (n, 0, 0)),
            pl.BlockSpec((Cp, 1), lambda n: (0, 0)),
            pl.BlockSpec((Cp, 1), lambda n: (0, 0)),
            pl.BlockSpec((1, ltot), lambda n: (0, 0)),
            pl.BlockSpec((9, Co, Cp), lambda n: (0, 0, 0)),
        ],
        out_specs=pl.BlockSpec((b_blk, Co, ltot), lambda n: (n, 0, 0)),
        compiler_params=pltpu.CompilerParams(
            dimension_semantics=("parallel",)),
        cost_estimate=pl.CostEstimate(flops=flops, transcendentals=0,
                                      bytes_accessed=bytes_accessed),
    )(slab, scale, shift, mask, w_taps)

    # Crop halo / tail positions; layout is already NCHW.
    # TODO(synk): downstream blocks could consume out_flat directly (and fold
    #             the halo re-pad into their own slab build) to skip this
    #             strided crop's extra HBM pass when chaining BNReLUConv.
    out = out_flat[:, :, :Hp * Wp].reshape(N, Co, Hp, Wp)[:, :, 1:H + 1, 1:W + 1]
    return out


def _reference(x_nchw, gamma, beta, w_oihw, eps=1e-5):
    """Pure-JAX reference of the PyTorch forward (training-mode BN)."""
    mean = x_nchw.mean(axis=(0, 2, 3), keepdims=True)
    var = x_nchw.var(axis=(0, 2, 3), keepdims=True)          # biased
    y = (x_nchw - mean) * jax.lax.rsqrt(var + eps)
    y = y * gamma.reshape(1, -1, 1, 1) + beta.reshape(1, -1, 1, 1)
    y = jnp.maximum(y, 0.0)
    return jax.lax.conv_general_dilated(
        y, w_oihw, window_strides=(1, 1), padding=((1, 1), (1, 1)),
        dimension_numbers=("NCHW", "OIHW", "NCHW"),
        precision=jax.lax.Precision.HIGHEST)


if __name__ == "__main__":
    ni, no = 4, 8                    # input / output feature maps
    N, H, W = 2, 16, 16

    key = jax.random.PRNGKey(0)
    kx, kg, kb, kw = jax.random.split(key, 4)

    x = jax.random.normal(kx, (N, ni, H, W), dtype=jnp.float32)          # NCHW
    # Shapes match nn.BatchNorm2d(ni) and nn.Conv2d(ni, no, 3, bias=False).
    gamma = 1.0 + 0.1 * jax.random.normal(kg, (ni,), dtype=jnp.float32)
    beta = 0.1 * jax.random.normal(kb, (ni,), dtype=jnp.float32)
    weight = 0.2 * jax.random.normal(kw, (no, ni, 3, 3), dtype=jnp.float32)

    fused = jax.jit(bn_relu_conv)
    out = jax.block_until_ready(fused(x, gamma, beta, weight))

    ref = jax.block_until_ready(_reference(x, gamma, beta, weight))
    assert out.shape == (N, no, H, W), out.shape
    max_err = jnp.max(jnp.abs(out - ref))
    assert jnp.allclose(out, ref, atol=5e-3, rtol=5e-3), \
        f"max abs err {max_err}"

    print("KERNEL_OK")
</pallas_src>

<mosaic_0001>
module attributes {stable_mosaic.version = 11 : i64} {
  func.func @_bn_relu_conv3x3_kernel(%arg0: i32, %arg1: memref<1x8x384xf32, #tpu.memory_space<vmem>>, %arg2: memref<8x1xf32, #tpu.memory_space<vmem>>, %arg3: memref<8x1xf32, #tpu.memory_space<vmem>>, %arg4: memref<1x384xf32, #tpu.memory_space<vmem>>, %arg5: memref<9x8x8xf32, #tpu.memory_space<vmem>>, %arg6: memref<1x8x384xf32, #tpu.memory_space<vmem>>) attributes {dimension_semantics = [#tpu.dimension_semantics<parallel>], iteration_bounds = array<i64: 2>, scalar_prefetch = 0 : i64, scratch_operands = 0 : i64, tpu.core_type = #tpu.core_type<tc>, window_params = [{transform_indices = @transform_0, window_bounds = array<i64: 1, 8, 384>}, {pipeline_mode = #tpu.pipeline_mode<synchronous>, transform_indices = @transform_1, window_bounds = array<i64: 8, 1>}, {pipeline_mode = #tpu.pipeline_mode<synchronous>, transform_indices = @transform_2, window_bounds = array<i64: 8, 1>}, {pipeline_mode = #tpu.pipeline_mode<synchronous>, transform_indices = @transform_3, window_bounds = array<i64: 1, 384>}, {pipeline_mode = #tpu.pipeline_mode<synchronous>, transform_indices = @transform_4, window_bounds = array<i64: 9, 8, 8>}, {transform_indices = @transform_5, window_bounds = array<i64: 1, 8, 384>}]} {
    %c0 = arith.constant 0 : index
    %c0_0 = arith.constant 0 : index
    %0 = vector.load %arg2[%c0, %c0_0] : memref<8x1xf32, #tpu.memory_space<vmem>>, vector<8x1xf32>
    %c0_1 = arith.constant 0 : index
    %c0_2 = arith.constant 0 : index
    %1 = vector.load %arg3[%c0_1, %c0_2] : memref<8x1xf32, #tpu.memory_space<vmem>>, vector<8x1xf32>
    %c0_3 = arith.constant 0 : index
    %c0_4 = arith.constant 0 : index
    %2 = vector.load %arg4[%c0_3, %c0_4] : memref<1x384xf32, #tpu.memory_space<vmem>>, vector<1x384xf32>
    %c0_5 = arith.constant 0 : index
    %c0_6 = arith.constant 0 : index
    %c0_7 = arith.constant 0 : index
    %3 = vector.load %arg5[%c0_5, %c0_6, %c0_7] : memref<9x8x8xf32, #tpu.memory_space<vmem>>, vector<9x8x8xf32>
    %c0_8 = arith.constant 0 : index
    %c0_9 = arith.constant 0 : index
    %c0_10 = arith.constant 0 : index
    %4 = vector.load %arg1[%c0_8, %c0_9, %c0_10] : memref<1x8x384xf32, #tpu.memory_space<vmem>>, vector<1x8x384xf32>
    %5 = vector.shape_cast %4 : vector<1x8x384xf32> to vector<8x384xf32>
    %6 = vector.broadcast %0 : vector<8x1xf32> to vector<8x384xf32>
    %7 = arith.mulf %5, %6 : vector<8x384xf32>
    %8 = vector.broadcast %1 : vector<8x1xf32> to vector<8x384xf32>
    %9 = arith.addf %7, %8 : vector<8x384xf32>
    %cst = arith.constant 0.000000e+00 : f32
    %10 = vector.broadcast %cst : f32 to vector<8x384xf32>
    %11 = arith.maximumf %9, %10 : vector<8x384xf32>
    %12 = vector.broadcast %2 : vector<1x384xf32> to vector<8x384xf32>
    %13 = arith.mulf %11, %12 : vector<8x384xf32>
    %c19_i32 = arith.constant 19 : i32
    %14 = tpu.dynamic_rotate %13 by %c19_i32 dim 1 : vector<8x384xf32>, i32 -> vector<8x384xf32>
    %15 = vector.extract_strided_slice %3 {offsets = [0, 0, 0], sizes = [1, 8, 8], strides = [1, 1, 1]} : vector<9x8x8xf32> to vector<1x8x8xf32>
    %16 = vector.shape_cast %15 : vector<1x8x8xf32> to vector<8x8xf32>
    %cst_11 = arith.constant dense<0.000000e+00> : vector<8x384xf32>
    %17 = tpu.matmul %16, %14, %cst_11 {dimension_numbers = #tpu.dot_dimension_numbers<[1], [0], [0], [1], [0, 0, 1, 1], [], []>} : vector<8x8xf32>, vector<8x384xf32>, vector<8x384xf32> -> vector<8x384xf32>
    %c18_i32 = arith.constant 18 : i32
    %18 = tpu.dynamic_rotate %13 by %c18_i32 dim 1 : vector<8x384xf32>, i32 -> vector<8x384xf32>
    %19 = vector.extract_strided_slice %3 {offsets = [1, 0, 0], sizes = [1, 8, 8], strides = [1, 1, 1]} : vector<9x8x8xf32> to vector<1x8x8xf32>
    %20 = vector.shape_cast %19 : vector<1x8x8xf32> to vector<8x8xf32>
    %cst_12 = arith.constant dense<0.000000e+00> : vector<8x384xf32>
    %21 = tpu.matmul %20, %18, %cst_12 {dimension_numbers = #tpu.dot_dimension_numbers<[1], [0], [0], [1], [0, 0, 1, 1], [], []>} : vector<8x8xf32>, vector<8x384xf32>, vector<8x384xf32> -> vector<8x384xf32>
    %22 = arith.addf %17, %21 : vector<8x384xf32>
    %c17_i32 = arith.constant 17 : i32
    %23 = tpu.dynamic_rotate %13 by %c17_i32 dim 1 : vector<8x384xf32>, i32 -> vector<8x384xf32>
    %24 = vector.extract_strided_slice %3 {offsets = [2, 0, 0], sizes = [1, 8, 8], strides = [1, 1, 1]} : vector<9x8x8xf32> to vector<1x8x8xf32>
    %25 = vector.shape_cast %24 : vector<1x8x8xf32> to vector<8x8xf32>
    %cst_13 = arith.constant dense<0.000000e+00> : vector<8x384xf32>
    %26 = tpu.matmul %25, %23, %cst_13 {dimension_numbers = #tpu.dot_dimension_numbers<[1], [0], [0], [1], [0, 0, 1, 1], [], []>} : vector<8x8xf32>, vector<8x384xf32>, vector<8x384xf32> -> vector<8x384xf32>
    %27 = arith.addf %22, %26 : vector<8x384xf32>
    %c1_i32 = arith.constant 1 : i32
    %28 = tpu.dynamic_rotate %13 by %c1_i32 dim 1 : vector<8x384xf32>, i32 -> vector<8x384xf32>
    %29 = vector.extract_strided_slice %3 {offsets = [3, 0, 0], sizes = [1, 8, 8], strides = [1, 1, 1]} : vector<9x8x8xf32> to vector<1x8x8xf32>
    %30 = vector.shape_cast %29 : vector<1x8x8xf32> to vector<8x8xf32>
    %cst_14 = arith.constant dense<0.000000e+00> : vector<8x384xf32>
    %31 = tpu.matmul %30, %28, %cst_14 {dimension_numbers = #tpu.dot_dimension_numbers<[1], [0], [0], [1], [0, 0, 1, 1], [], []>} : vector<8x8xf32>, vector<8x384xf32>, vector<8x384xf32> -> vector<8x384xf32>
    %32 = arith.addf %27, %31 : vector<8x384xf32>
    %33 = vector.extract_strided_slice %3 {offsets = [4, 0, 0], sizes = [1, 8, 8], strides = [1, 1, 1]} : vector<9x8x8xf32> to vector<1x8x8xf32>
    %34 = vector.shape_cast %33 : vector<1x8x8xf32> to vector<8x8xf32>
    %cst_15 = arith.constant dense<0.000000e+00> : vector<8x384xf32>
    %35 = tpu.matmul %34, %13, %cst_15 {dimension_numbers = #tpu.dot_dimension_numbers<[1], [0], [0], [1], [0, 0, 1, 1], [], []>} : vector<8x8xf32>, vector<8x384xf32>, vector<8x384xf32> -> vector<8x384xf32>
    %36 = arith.addf %32, %35 : vector<8x384xf32>
    %c383_i32 = arith.constant 383 : i32
    %37 = tpu.dynamic_rotate %13 by %c383_i32 dim 1 : vector<8x384xf32>, i32 -> vector<8x384xf32>
    %38 = vector.extract_strided_slice %3 {offsets = [5, 0, 0], sizes = [1, 8, 8], strides = [1, 1, 1]} : vector<9x8x8xf32> to vector<1x8x8xf32>
    %39 = vector.shape_cast %38 : vector<1x8x8xf32> to vector<8x8xf32>
    %cst_16 = arith.constant dense<0.000000e+00> : vector<8x384xf32>
    %40 = tpu.matmul %39, %37, %cst_16 {dimension_numbers = #tpu.dot_dimension_numbers<[1], [0], [0], [1], [0, 0, 1, 1], [], []>} : vector<8x8xf32>, vector<8x384xf32>, vector<8x384xf32> -> vector<8x384xf32>
    %41 = arith.addf %36, %40 : vector<8x384xf32>
    %c367_i32 = arith.constant 367 : i32
    %42 = tpu.dynamic_rotate %13 by %c367_i32 dim 1 : vector<8x384xf32>, i32 -> vector<8x384xf32>
    %43 = vector.extract_strided_slice %3 {offsets = [6, 0, 0], sizes = [1, 8, 8], strides = [1, 1, 1]} : vector<9x8x8xf32> to vector<1x8x8xf32>
    %44 = vector.shape_cast %43 : vector<1x8x8xf32> to vector<8x8xf32>
    %cst_17 = arith.constant dense<0.000000e+00> : vector<8x384xf32>
    %45 = tpu.matmul %44, %42, %cst_17 {dimension_numbers = #tpu.dot_dimension_numbers<[1], [0], [0], [1], [0, 0, 1, 1], [], []>} : vector<8x8xf32>, vector<8x384xf32>, vector<8x384xf32> -> vector<8x384xf32>
    %46 = arith.addf %41, %45 : vector<8x384xf32>
    %c366_i32 = arith.constant 366 : i32
    %47 = tpu.dynamic_rotate %13 by %c366_i32 dim 1 : vector<8x384xf32>, i32 -> vector<8x384xf32>
    %48 = vector.extract_strided_slice %3 {offsets = [7, 0, 0], sizes = [1, 8, 8], strides = [1, 1, 1]} : vector<9x8x8xf32> to vector<1x8x8xf32>
    %49 = vector.shape_cast %48 : vector<1x8x8xf32> to vector<8x8xf32>
    %cst_18 = arith.constant dense<0.000000e+00> : vector<8x384xf32>
    %50 = tpu.matmul %49, %47, %cst_18 {dimension_numbers = #tpu.dot_dimension_numbers<[1], [0], [0], [1], [0, 0, 1, 1], [], []>} : vector<8x8xf32>, vector<8x384xf32>, vector<8x384xf32> -> vector<8x384xf32>
    %51 = arith.addf %46, %50 : vector<8x384xf32>
    %c365_i32 = arith.constant 365 : i32
    %52 = tpu.dynamic_rotate %13 by %c365_i32 dim 1 : vector<8x384xf32>, i32 -> vector<8x384xf32>
    %53 = vector.extract_strided_slice %3 {offsets = [8, 0, 0], sizes = [1, 8, 8], strides = [1, 1, 1]} : vector<9x8x8xf32> to vector<1x8x8xf32>
    %54 = vector.shape_cast %53 : vector<1x8x8xf32> to vector<8x8xf32>
    %cst_19 = arith.constant dense<0.000000e+00> : vector<8x384xf32>
    %55 = tpu.matmul %54, %52, %cst_19 {dimension_numbers = #tpu.dot_dimension_numbers<[1], [0], [0], [1], [0, 0, 1, 1], [], []>} : vector<8x8xf32>, vector<8x384xf32>, vector<8x384xf32> -> vector<8x384xf32>
    %56 = arith.addf %51, %55 : vector<8x384xf32>
    %c0_20 = arith.constant 0 : index
    %c0_21 = arith.constant 0 : index
    %c0_22 = arith.constant 0 : index
    %57 = vector.load %arg6[%c0_20, %c0_21, %c0_22] : memref<1x8x384xf32, #tpu.memory_space<vmem>>, vector<1x8x384xf32>
    %58 = vector.shape_cast %57 : vector<1x8x384xf32> to vector<8x384xf32>
    %59 = vector.shape_cast %56 : vector<8x384xf32> to vector<1x8x384xf32>
    tpu.vector_store %arg6[%c0_20, %c0_21, %c0_22], %59 {strides = array<i32>} : memref<1x8x384xf32, #tpu.memory_space<vmem>>, vector<1x8x384xf32>,
    return
  }
  func.func @transform_0(%arg0: i32) -> (i32, i32, i32) {
    %c0_i32 = arith.constant 0 : i32
    %c0_i32_0 = arith.constant 0 : i32
    %c0_i32_1 = arith.constant 0 : i32
    return %arg0, %c0_i32, %c0_i32_0 : i32, i32, i32
  }
  func.func @transform_1(%arg0: i32) -> (i32, i32) {
    %c0_i32 = arith.constant 0 : i32
    %c0_i32_0 = arith.constant 0 : i32
    %c0_i32_1 = arith.constant 0 : i32
    return %c0_i32, %c0_i32_0 : i32, i32
  }
  func.func @transform_2(%arg0: i32) -> (i32, i32) {
    %c0_i32 = arith.constant 0 : i32
    %c0_i32_0 = arith.constant 0 : i32
    %c0_i32_1 = arith.constant 0 : i32
    return %c0_i32, %c0_i32_0 : i32, i32
  }
  func.func @transform_3(%arg0: i32) -> (i32, i32) {
    %c0_i32 = arith.constant 0 : i32
    %c0_i32_0 = arith.constant 0 : i32
    %c0_i32_1 = arith.constant 0 : i32
    return %c0_i32, %c0_i32_0 : i32, i32
  }
  func.func @transform_4(%arg0: i32) -> (i32, i32, i32) {
    %c0_i32 = arith.constant 0 : i32
    %c0_i32_0 = arith.constant 0 : i32
    %c0_i32_1 = arith.constant 0 : i32
    %c0_i32_2 = arith.constant 0 : i32
    return %c0_i32, %c0_i32_0, %c0_i32_1 : i32, i32, i32
  }
  func.func @transform_5(%arg0: i32) -> (i32, i32, i32) {
    %c0_i32 = arith.constant 0 : i32
    %c0_i32_0 = arith.constant 0 : i32
    %c0_i32_1 = arith.constant 0 : i32
    return %arg0, %c0_i32, %c0_i32_0 : i32, i32, i32
  }
}

</mosaic_0001>

<llo_original>
// kernel: bn_relu_conv.1
$region0: #{bn_relu_conv.1}
  #allocation0 [shape = 'u32[]', space=smem, size = 0x4, offset = 0x4, fixed_abs, tag = 'smem constant byte address 0x4 - core index']
  #allocation1 [shape = 'u32[144,128]{1,0:T(1,128)}', space=vmem, size = 0x12000, scoped, tag = 'internal scratch']
  %s0 = inlined_call_operand.vmem [shape: f32[2,8,384], index: 0, kind: input, shape index: {}]
  %s1 = inlined_call_operand.vmem [shape: f32[8,1], index: 1, kind: input, shape index: {}]
  %s2 = inlined_call_operand.vmem [shape: f32[8,1], index: 2, kind: input, shape index: {}]
  %s3 = inlined_call_operand.vmem [shape: f32[1,384], index: 3, kind: input, shape index: {}]
  %s4 = inlined_call_operand.vmem [shape: f32[9,8,8], index: 4, kind: input, shape index: {}]
  %s5 = inlined_call_operand.vmem [shape: f32[2,8,384], index: 5, kind: output, shape index: {}]
  %s6 = sld [smem:[#allocation0]]
  $region53: #{bn_relu_conv.1} parent=0
    _
  %s8 = ssub.s32 1, %s6
  %s9 = scalar_select 0, %s8, %s6
  loop: start=0, step=1, limit=4
  $region2: #{bn_relu_conv.1} parent=0 // loop_pre_header
    _
  $region3: #{bn_relu_conv.1} parent=0 // loop_header
    %s11 = sphi 0, %s15
    %p12 = scmp.ge.s32.totalorder %s11, 4
    %s21 = sphi 0, %s23
    %s24 = sphi 0, %s21
    %s25 = sphi 0, %s24
    %s41 = sphi 0, %s25
    %s45 = sphi 0, %s45
    %s47 = sphi 0, %s45
    %s48 = sphi 0, %s47
    %s62 = sphi 0, %s48
    %s66 = sphi 0, %s66
    %s68 = sphi 0, %s66
    %s69 = sphi 0, %s68
    %s83 = sphi 0, %s69
    %s87 = sphi 0, %s87
    %s89 = sphi 0, %s87
    %s90 = sphi 0, %s89
    %s104 = sphi 0, %s90
    %s108 = sphi 0, %s108
    %s110 = sphi 0, %s108
    %s111 = sphi 0, %s110
    %s125 = sphi 0, %s111
    %s131 = sphi 0, %s133
    %s134 = sphi 0, %s131
    %s135 = sphi 0, %s134
    %s151 = sphi 0, %s135
  $region4: #{bn_relu_conv.1} parent=0 // loop_header_branch
    %14 = sbr.rel (%p12) target = $region8
  $region5: #{bn_relu_conv.1} parent=0 // loop_body
    %s16 = ssub.s32 %s11, 1
    %s17 = ssub.s32 %s11, 2
    %s18 = sadd.s32 %s11, 1
    %s19 = ssub.s32 %s11, %s18
    %p20 = scmp.eq.s32.totalorder %s19, 0
    %s22 = sadd.s32 %s21, 1
    %s23 = scalar_select %p20, %s21, %s22
    %p26 = pneg %p20
    %p27 = scmp.eq.s32.totalorder %s11, 1
    %p28 = por %p26, %p27
    %p29 = scmp.ne.s32.totalorder %s21, %s24
    %p30 = scmp.eq.s32.totalorder %s11, 0
    %p31 = por %p29, %p30
    %p32 = scmp.ne.s32.totalorder %s21, %s24
    %p33 = scmp.eq.s32.totalorder %s16, 1
    %p34 = por %p32, %p33
    %p35 = scmp.ne.s32.totalorder %s24, %s25
    %p36 = scmp.eq.s32.totalorder %s16, 0
    %p37 = por %p35, %p36
    %p38 = scmp.ne.s32.totalorder %s24, %s25
    %p39 = scmp.eq.s32.totalorder %s17, 1
    %p40 = por %p38, %p39
    %p42 = scmp.ne.s32.totalorder %s25, %s41
    %p43 = scmp.eq.s32.totalorder %s17, 0
    %p44 = por %p42, %p43
    %s46 = sadd.s32 %s45, 1
    %p49 = scmp.eq.s32.totalorder %s11, 1
    %p50 = scmp.ne.s32.totalorder %s45, %s47
    %p51 = scmp.eq.s32.totalorder %s11, 0
    %p52 = por %p50, %p51
    %p53 = scmp.ne.s32.totalorder %s45, %s47
    %p54 = scmp.eq.s32.totalorder %s16, 1
    %p55 = por %p53, %p54
    %p56 = scmp.ne.s32.totalorder %s47, %s48
    %p57 = scmp.eq.s32.totalorder %s16, 0
    %p58 = por %p56, %p57
    %p59 = scmp.ne.s32.totalorder %s47, %s48
    %p60 = scmp.eq.s32.totalorder %s17, 1
    %p61 = por %p59, %p60
    %p63 = scmp.ne.s32.totalorder %s48, %s62
    %p64 = scmp.eq.s32.totalorder %s17, 0
    %p65 = por %p63, %p64
    %s67 = sadd.s32 %s66, 1
    %p70 = scmp.eq.s32.totalorder %s11, 1
    %p71 = scmp.ne.s32.totalorder %s66, %s68
    %p72 = scmp.eq.s32.totalorder %s11, 0
    %p73 = por %p71, %p72
    %p74 = scmp.ne.s32.totalorder %s66, %s68
    %p75 = scmp.eq.s32.totalorder %s16, 1
    %p76 = por %p74, %p75
    %p77 = scmp.ne.s32.totalorder %s68, %s69
    %p78 = scmp.eq.s32.totalorder %s16, 0
    %p79 = por %p77, %p78
    %p80 = scmp.ne.s32.totalorder %s68, %s69
    %p81 = scmp.eq.s32.totalorder %s17, 1
    %p82 = por %p80, %p81
    %p84 = scmp.ne.s32.totalorder %s69, %s83
    %p85 = scmp.eq.s32.totalorder %s17, 0
    %p86 = por %p84, %p85
    %s88 = sadd.s32 %s87, 1
    %p91 = scmp.eq.s32.totalorder %s11, 1
    %p92 = scmp.ne.s32.totalorder %s87, %s89
    %p93 = scmp.eq.s32.totalorder %s11, 0
    %p94 = por %p92, %p93
    %p95 = scmp.ne.s32.totalorder %s87, %s89
    %p96 = scmp.eq.s32.totalorder %s16, 1
    %p97 = por %p95, %p96
    %p98 = scmp.ne.s32.totalorder %s89, %s90
    %p99 = scmp.eq.s32.totalorder %s16, 0
    %p100 = por %p98, %p99
    %p101 = scmp.ne.s32.totalorder %s89, %s90
    %p102 = scmp.eq.s32.totalorder %s17, 1
    %p103 = por %p101, %p102
    %p105 = scmp.ne.s32.totalorder %s90, %s104
    %p106 = scmp.eq.s32.totalorder %s17, 0
    %p107 = por %p105, %p106
    %s109 = sadd.s32 %s108, 1
    %p112 = scmp.eq.s32.totalorder %s11, 1
    %p113 = scmp.ne.s32.totalorder %s108, %s110
    %p114 = scmp.eq.s32.totalorder %s11, 0
    %p115 = por %p113, %p114
    %p116 = scmp.ne.s32.totalorder %s108, %s110
    %p117 = scmp.eq.s32.totalorder %s16, 1
    %p118 = por %p116, %p117
    %p119 = scmp.ne.s32.totalorder %s110, %s111
    %p120 = scmp.eq.s32.totalorder %s16, 0
    %p121 = por %p119, %p120
    %p122 = scmp.ne.s32.totalorder %s110, %s111
    %p123 = scmp.eq.s32.totalorder %s17, 1
    %p124 = por %p122, %p123
    %p126 = scmp.ne.s32.totalorder %s111, %s125
    %p127 = scmp.eq.s32.totalorder %s17, 0
    %p128 = por %p126, %p127
    %s129 = ssub.s32 %s11, %s18
    %p130 = scmp.eq.s32.totalorder %s129, 0
    %s132 = sadd.s32 %s131, 1
    %s133 = scalar_select %p130, %s131, %s132
    %p136 = pneg %p130
    %p137 = scmp.eq.s32.totalorder %s11, 1
    %p138 = por %p136, %p137
    %p139 = scmp.ne.s32.totalorder %s131, %s134
    %p140 = scmp.eq.s32.totalorder %s11, 0
    %p141 = por %p139, %p140
    %p142 = scmp.ne.s32.totalorder %s131, %s134
    %p143 = scmp.eq.s32.totalorder %s16, 1
    %p144 = por %p142, %p143
    %p145 = scmp.ne.s32.totalorder %s134, %s135
    %p146 = scmp.eq.s32.totalorder %s16, 0
    %p147 = por %p145, %p146
    %p148 = scmp.ne.s32.totalorder %s134, %s135
    %p149 = scmp.eq.s32.totalorder %s17, 1
    %p150 = por %p148, %p149
    %p152 = scmp.ne.s32.totalorder %s135, %s151
    %p153 = scmp.eq.s32.totalorder %s17, 0
    %p154 = por %p152, %p153
    %p155 = scmp.le.s32.totalorder 1, %s11
    %p156 = scmp.lt.s32.totalorder %s11, 3
    %p157 = pnand %p155, %p156
    %p158 = pneg %p157
    // Predicated region
    $region9: #{bn_relu_conv.1} parent=5 // pred_check
      _
    $region10: #{bn_relu_conv.1} parent=5 // pred_check_branch
      %160 = sbr.rel (%p157) target = $region12
    $region11: #{bn_relu_conv.1} parent=5 // pred_region
      %s161 = ssub.s32 %s11, 1
      // Predicated region
      $region13: #{bn_relu_conv.1} parent=11 // pred_check
        %p162 = pneg %p58
      $region14: #{bn_relu_conv.1} parent=11 // pred_check_branch
        %164 = sbr.rel (%p162) target = $region16
      $region15: #{bn_relu_conv.1} parent=11 // pred_region
        _
      $region16: #{bn_relu_conv.1} parent=11 // pred_fallthru
        _
      // Predicated region
      $region17: #{bn_relu_conv.1} parent=11 // pred_check
        %p165 = pneg %p79
      $region18: #{bn_relu_conv.1} parent=11 // pred_check_branch
        %167 = sbr.rel (%p165) target = $region20
      $region19: #{bn_relu_conv.1} parent=11 // pred_region
        _
      $region20: #{bn_relu_conv.1} parent=11 // pred_fallthru
        _
      // Predicated region
      $region21: #{bn_relu_conv.1} parent=11 // pred_check
        %p168 = pneg %p100
      $region22: #{bn_relu_conv.1} parent=11 // pred_check_branch
        %170 = sbr.rel (%p168) target = $region24
      $region23: #{bn_relu_conv.1} parent=11 // pred_region
        _
      $region24: #{bn_relu_conv.1} parent=11 // pred_fallthru
        _
      // Predicated region
      $region25: #{bn_relu_conv.1} parent=11 // pred_check
        %p171 = pneg %p121
      $region26: #{bn_relu_conv.1} parent=11 // pred_check_branch
        %173 = sbr.rel (%p171) target = $region28
      $region27: #{bn_relu_conv.1} parent=11 // pred_region
        _
      $region28: #{bn_relu_conv.1} parent=11 // pred_fallthru
        _
    $region12: #{bn_relu_conv.1} parent=5 // pred_fallthru
      _
    %p174 = scmp.lt.s32.totalorder %s11, 2
    // Predicated region
    $region29: #{bn_relu_conv.1} parent=5 // pred_check
      %p175 = pneg %p174
    $region30: #{bn_relu_conv.1} parent=5 // pred_check_branch
      %177 = sbr.rel (%p175) target = $region32
    $region31: #{bn_relu_conv.1} parent=5 // pred_region
      // Predicated region
      $region33: #{bn_relu_conv.1} parent=31 // pred_check
        %p178 = pneg %p31
      $region34: #{bn_relu_conv.1} parent=31 // pred_check_branch
        %180 = sbr.rel (%p178) target = $region36
      $region35: #{bn_relu_conv.1} parent=31 // pred_region
        %p181 = scmp.lt.s32.totalorder %s11, 1
        %s182 = scalar_select %p181, %s11, 1
        %s183 = smul.addr %s182, 3
        %s184 = smul.addr %s183, 8
        %s185 = scalar_lea.vmem %s0, %s184
      $region36: #{bn_relu_conv.1} parent=31 // pred_fallthru
        _
    $region32: #{bn_relu_conv.1} parent=5 // pred_fallthru
      _
    %p186 = scmp.le.s32.totalorder 1, %s11
    %p187 = scmp.lt.s32.totalorder %s11, 3
    %p188 = pnand %p186, %p187
    %p189 = pneg %p188
    // Predicated region
    $region37: #{bn_relu_conv.1} parent=5 // pred_check
      _
    $region38: #{bn_relu_conv.1} parent=5 // pred_check_branch
      %191 = sbr.rel (%p188) target = $region40
    $region39: #{bn_relu_conv.1} parent=5 // pred_region
      %s192 = ssub.s32 %s11, 1
      %p193 = scmp.lt.s32.totalorder %s16, 1
      %s194 = scalar_select %p193, %s16, 1
      %s195 = smul.addr %s194, 3
      %s196 = smul.addr %s195, 8
      %s197 = scalar_lea.vmem %s0, %s196
      %p198 = pneg %p37
      %p199 = pneg %p34
      %p200 = pneg %p58
      %p201 = pneg %p55
      %p202 = pneg %p79
      %p203 = pneg %p76
      %p204 = pneg %p100
      %p205 = pneg %p97
      %p206 = pneg %p121
      %p207 = pneg %p118
      %p208 = pneg %p147
      %p209 = pneg %p144
      %p210 = scmp.lt.s32.totalorder %s16, 1
      %s211 = scalar_select %p210, %s16, 1
      %s212 = smul.addr %s211, 3
      %s213 = smul.addr %s212, 8
      %s214 = scalar_lea.vmem %s5, %s213
      %p215 = scmp.lt.s32.totalorder %s16, 1
      %s216 = scalar_select %p215, %s16, 1
      %s217 = smul.addr %s216, 3
      %s218 = smul.addr %s217, 8
      %s219 = scalar_lea.vmem %s0, %s218
      %p220 = scmp.lt.s32.totalorder %s16, 1
      %s221 = scalar_select %p220, %s16, 1
      %s222 = smul.addr %s221, 3
      %s223 = smul.addr %s222, 8
      %s224 = scalar_lea.vmem %s5, %s223
      %v225 = vld [vmem:[%s1] sm:$0xff]
      %v226 = vld [vmem:[%s2] sm:$0xff]
      %v227 = vld [vmem:[%s3] sm:$0x7]
      %v228 = vld [vmem:[%s4] sm:$0xff]
      %v229 = vld [vmem:[%s4 + $0x8] sm:$0xff]
      %v230 = vld [vmem:[%s4 + $0x10] sm:$0xff]
      %v231 = vld [vmem:[%s4 + $0x18] sm:$0xff]
      %v232 = vld [vmem:[%s4 + $0x20] sm:$0xff]
      %v233 = vld [vmem:[%s4 + $0x28] sm:$0xff]
      %v234 = vld [vmem:[%s4 + $0x30] sm:$0xff]
      %v235 = vld [vmem:[%s4 + $0x38] sm:$0xff]
      %v236 = vld [vmem:[%s4 + $0x40] sm:$0xff]
      %v237 = vld [vmem:[%s219] sm:$0xff]
      %v238 = vld [vmem:[%s219 + $0x8] sm:$0xff]
      %v239 = vld [vmem:[%s219 + $0x10] sm:$0xff]
      %241 = vset.pattern.permute.xlu0 0
      %242 = vperm.xlu0 %241, %v225
      %v243 = vpop.permute.xlu0 %242
      %v245 = vmul.f32 %v237, %v243
      %v246 = vmul.f32 %v238, %v243
      %v247 = vmul.f32 %v239, %v243
      %249 = vset.pattern.permute.xlu0 0
      %250 = vperm.xlu0 %249, %v226
      %v251 = vpop.permute.xlu0 %250
      %v253 = vadd.f32 %v245, %v251
      %v254 = vadd.f32 %v246, %v251
      %v255 = vadd.f32 %v247, %v251
      %v256 = vmax.f32 %v253, 0.0
      %v257 = vmax.f32 %v254, 0.0
      %v258 = vmax.f32 %v255, 0.0
      %v260 = vlaneseq
      %v261 = vshrl.u32 %v260, 7
      %v262 = vsub.s32 0, %v261
      %v263 = vrot.slane %v227, %v262
      %v264 = vlaneseq
      %v265 = vshrl.u32 %v264, 7
      %v266 = vsub.s32 1, %v265
      %v267 = vrot.slane %v227, %v266
      %v268 = vlaneseq
      %v269 = vshrl.u32 %v268, 7
      %v270 = vsub.s32 2, %v269
      %v271 = vrot.slane %v227, %v270
      %v275 = vmul.f32 %v256, %v263
      %v276 = vmul.f32 %v257, %v267
      %v277 = vmul.f32 %v258, %v271
      %278 = vrot.lane.b32.xlu0 %v275, 19
      %v279 = vpop.permute.xlu0 %278
      %280 = vrot.lane.b32.xlu0 %v276, 19
      %v281 = vpop.permute.xlu0 %280
      %282 = vrot.lane.b32.xlu0 %v277, 19
      %v283 = vpop.permute.xlu0 %282
      %v284 = vlaneseq
      %v285 = vand.u32 %v284, 127
      %vm286 = vcmp.lt.s32.totalorder %v285, 19
      %v287 = vsel %vm286, %v281, %v283
      %v288 = vsel %vm286, %v279, %v281
      %v289 = vsel %vm286, %v283, %v279
      %290 = vrot.lane.b32.xlu0 %v275, 18
      %v291 = vpop.permute.xlu0 %290
      %292 = vrot.lane.b32.xlu0 %v276, 18
      %v293 = vpop.permute.xlu0 %292
      %294 = vrot.lane.b32.xlu0 %v277, 18
      %v295 = vpop.permute.xlu0 %294
      %vm296 = vcmp.lt.s32.totalorder %v285, 18
      %v297 = vsel %vm296, %v293, %v295
      %v298 = vsel %vm296, %v291, %v293
      %v299 = vsel %vm296, %v295, %v291
      %vm300 = vcmask 64512
      %v302 = vsel %vm300, %v229, 0
      %304 = vmatprep.subr.mxu0 %v298
      %305 = vmatpush1.msra.mxu0 %v299
      %306 = vmatprep.subr.mxu0 0.0
      %307 = vmatpush1.msra.mxu0 0.0
      %308 = vmatprep.subr.mxu0 0.0
      %309 = vmatpush1.msra.mxu0 0.0
      %310 = vmatprep.subr.mxu0 0.0
      %311 = vmatpush1.msra.mxu0 0.0
      %312 = vmatprep.subr.mxu0 0.0
      %313 = vmatpush1.msra.mxu0 0.0
      %314 = vmatprep.subr.mxu0 0.0
      %315 = vmatpush1.msra.mxu0 0.0
      %316 = vmatprep.subr.mxu0 0.0
      %317 = vmatpush1.msra.mxu0 0.0
      %318 = vmatprep.subr.mxu0 0.0
      %319 = vmatpush1.msra.mxu0 0.0
      %320 = vmatprep.subr.mxu0 0.0
      %321 = vmatpush1.msra.mxu0 0.0
      %322 = vmatprep.subr.mxu0 0.0
      %323 = vmatpush1.msra.mxu0 0.0
      %324 = vmatprep.subr.mxu0 0.0
      %325 = vmatpush1.msra.mxu0 0.0
      %326 = vmatprep.subr.mxu0 0.0
      %327 = vmatpush1.msra.mxu0 0.0
      %328 = vmatprep.subr.mxu0 0.0
      %329 = vmatpush1.msra.mxu0 0.0
      %330 = vmatprep.subr.mxu0 0.0
      %331 = vmatpush1.msra.mxu0 0.0
      %332 = vmatprep.subr.mxu0 0.0
      %333 = vmatpush1.msra.mxu0 0.0
      %334 = vmatprep.subr.mxu0 0.0
      %335 = vmatpush1.msra.mxu0 0.0
      %336 = vmatprep.subr.mxu0 0.0
      %337 = vmatpush1.msra.mxu0 0.0
      %338 = vmatprep.subr.mxu0 0.0
      %339 = vmatpush1.msra.mxu0 0.0
      %340 = vmatprep.subr.mxu0 0.0
      %341 = vmatpush1.msra.mxu0 0.0
      %342 = vmatprep.subr.mxu0 0.0
      %343 = vmatpush1.msra.mxu0 0.0
      %344 = vmatprep.subr.mxu0 0.0
      %345 = vmatpush1.msra.mxu0 0.0
      %346 = vmatprep.subr.mxu0 0.0
      %347 = vmatpush1.msra.mxu0 0.0
      %348 = vmatprep.subr.mxu0 0.0
      %349 = vmatpush1.msra.mxu0 0.0
      %350 = vmatprep.subr.mxu0 0.0
      %351 = vmatpush1.msra.mxu0 0.0
      %352 = vmatprep.subr.mxu0 0.0
      %353 = vmatpush1.msra.mxu0 0.0
      %354 = vmatprep.subr.mxu0 0.0
      %355 = vmatpush1.msra.mxu0 0.0
      %356 = vmatprep.subr.mxu0 0.0
      %357 = vmatpush1.msra.mxu0 0.0
      %358 = vmatprep.subr.mxu0 0.0
      %359 = vmatpush1.msra.mxu0 0.0
      %360 = vmatprep.subr.mxu0 0.0
      %361 = vmatpush1.msra.mxu0 0.0
      %362 = vmatprep.subr.mxu0 0.0
      %363 = vmatpush1.msra.mxu0 0.0
      %364 = vmatprep.subr.mxu0 0.0
      %365 = vmatpush1.msra.mxu0 0.0
      %366 = vmatprep.subr.mxu0 0.0
      %367 = vmatpush1.msra.mxu0 0.0
      %368 = vmatprep.mubr.f32.mxu0 0.0
      %369 = vmatmul.mubr.f32.gmra.mrb[0].mxu0 %v302
      %v370 = vpop.f32.mrb[0].mxu0
      %v371 = vadd.f32 0.0, %v370
      %v372 = vpop.f32.mrb[0].mxu0
      %v373 = vadd.f32 0.0, %v372
      %374 = vdwg.mxu0
      %375 = vmatprep.subr.mxu0 0.0
      %376 = vmatpush1.msra.mxu0 %v297
      %377 = vmatprep.subr.mxu0 0.0
      %378 = vmatpush1.msra.mxu0 0.0
      %379 = vmatprep.subr.mxu0 0.0
      %380 = vmatpush1.msra.mxu0 0.0
      %381 = vmatprep.subr.mxu0 0.0
      %382 = vmatpush1.msra.mxu0 0.0
      %383 = vmatprep.subr.mxu0 0.0
      %384 = vmatpush1.msra.mxu0 0.0
      %385 = vmatprep.subr.mxu0 0.0
      %386 = vmatpush1.msra.mxu0 0.0
      %387 = vmatprep.subr.mxu0 0.0
      %388 = vmatpush1.msra.mxu0 0.0
      %389 = vmatprep.subr.mxu0 0.0
      %390 = vmatpush1.msra.mxu0 0.0
      %391 = vmatprep.subr.mxu0 0.0
      %392 = vmatpush1.msra.mxu0 0.0
      %393 = vmatprep.subr.mxu0 0.0
      %394 = vmatpush1.msra.mxu0 0.0
      %395 = vmatprep.subr.mxu0 0.0
      %396 = vmatpush1.msra.mxu0 0.0
      %397 = vmatprep.subr.mxu0 0.0
      %398 = vmatpush1.msra.mxu0 0.0
      %399 = vmatprep.subr.mxu0 0.0
      %400 = vmatpush1.msra.mxu0 0.0
      %401 = vmatprep.subr.mxu0 0.0
      %402 = vmatpush1.msra.mxu0 0.0
      %403 = vmatprep.subr.mxu0 0.0
      %404 = vmatpush1.msra.mxu0 0.0
      %405 = vmatprep.subr.mxu0 0.0
      %406 = vmatpush1.msra.mxu0 0.0
      %407 = vmatprep.subr.mxu0 0.0
      %408 = vmatpush1.msra.mxu0 0.0
      %409 = vmatprep.subr.mxu0 0.0
      %410 = vmatpush1.msra.mxu0 0.0
      %411 = vmatprep.subr.mxu0 0.0
      %412 = vmatpush1.msra.mxu0 0.0
      %413 = vmatprep.subr.mxu0 0.0
      %414 = vmatpush1.msra.mxu0 0.0
      %415 = vmatprep.subr.mxu0 0.0
      %416 = vmatpush1.msra.mxu0 0.0
      %417 = vmatprep.subr.mxu0 0.0
      %418 = vmatpush1.msra.mxu0 0.0
      %419 = vmatprep.subr.mxu0 0.0
      %420 = vmatpush1.msra.mxu0 0.0
      %421 = vmatprep.subr.mxu0 0.0
      %422 = vmatpush1.msra.mxu0 0.0
      %423 = vmatprep.subr.mxu0 0.0
      %424 = vmatpush1.msra.mxu0 0.0
      %425 = vmatprep.subr.mxu0 0.0
      %426 = vmatpush1.msra.mxu0 0.0
      %427 = vmatprep.subr.mxu0 0.0
      %428 = vmatpush1.msra.mxu0 0.0
      %429 = vmatprep.subr.mxu0 0.0
      %430 = vmatpush1.msra.mxu0 0.0
      %431 = vmatprep.subr.mxu0 0.0
      %432 = vmatpush1.msra.mxu0 0.0
      %433 = vmatprep.subr.mxu0 0.0
      %434 = vmatpush1.msra.mxu0 0.0
      %435 = vmatprep.subr.mxu0 0.0
      %436 = vmatpush1.msra.mxu0 0.0
      %437 = vmatprep.subr.mxu0 0.0
      %438 = vmatpush1.msra.mxu0 0.0
      %439 = vmatprep.mubr.f32.mxu0 0.0
      %440 = vmatmul.mubr.f32.gmra.mrb[0].mxu0 %v302
      %v441 = vpop.f32.mrb[0].mxu0
      %v442 = vadd.f32 0.0, %v441
      %v443 = vpop.f32.mrb[0].mxu0
      %444 = vdwg.mxu0
      %v446 = vsel %vm300, %v228, 0
      %448 = vmatprep.subr.mxu0 %v288
      %449 = vmatpush1.msra.mxu0 %v289
      %450 = vmatprep.subr.mxu0 0.0
      %451 = vmatpush1.msra.mxu0 0.0
      %452 = vmatprep.subr.mxu0 0.0
      %453 = vmatpush1.msra.mxu0 0.0
      %454 = vmatprep.subr.mxu0 0.0
      %455 = vmatpush1.msra.mxu0 0.0
      %456 = vmatprep.subr.mxu0 0.0
      %457 = vmatpush1.msra.mxu0 0.0
      %458 = vmatprep.subr.mxu0 0.0
      %459 = vmatpush1.msra.mxu0 0.0
      %460 = vmatprep.subr.mxu0 0.0
      %461 = vmatpush1.msra.mxu0 0.0
      %462 = vmatprep.subr.mxu0 0.0
      %463 = vmatpush1.msra.mxu0 0.0
      %464 = vmatprep.subr.mxu0 0.0
      %465 = vmatpush1.msra.mxu0 0.0
      %466 = vmatprep.subr.mxu0 0.0
      %467 = vmatpush1.msra.mxu0 0.0
      %468 = vmatprep.subr.mxu0 0.0
      %469 = vmatpush1.msra.mxu0 0.0
      %470 = vmatprep.subr.mxu0 0.0
      %471 = vmatpush1.msra.mxu0 0.0
      %472 = vmatprep.subr.mxu0 0.0
      %473 = vmatpush1.msra.mxu0 0.0
      %474 = vmatprep.subr.mxu0 0.0
      %475 = vmatpush1.msra.mxu0 0.0
      %476 = vmatprep.subr.mxu0 0.0
      %477 = vmatpush1.msra.mxu0 0.0
      %478 = vmatprep.subr.mxu0 0.0
      %479 = vmatpush1.msra.mxu0 0.0
      %480 = vmatprep.subr.mxu0 0.0
      %481 = vmatpush1.msra.mxu0 0.0
      %482 = vmatprep.subr.mxu0 0.0
      %483 = vmatpush1.msra.mxu0 0.0
      %484 = vmatprep.subr.mxu0 0.0
      %485 = vmatpush1.msra.mxu0 0.0
      %486 = vmatprep.subr.mxu0 0.0
      %487 = vmatpush1.msra.mxu0 0.0
      %488 = vmatprep.subr.mxu0 0.0
      %489 = vmatpush1.msra.mxu0 0.0
      %490 = vmatprep.subr.mxu0 0.0
      %491 = vmatpush1.msra.mxu0 0.0
      %492 = vmatprep.subr.mxu0 0.0
      %493 = vmatpush1.msra.mxu0 0.0
      %494 = vmatprep.subr.mxu0 0.0
      %495 = vmatpush1.msra.mxu0 0.0
      %496 = vmatprep.subr.mxu0 0.0
      %497 = vmatpush1.msra.mxu0 0.0
      %498 = vmatprep.subr.mxu0 0.0
      %499 = vmatpush1.msra.mxu0 0.0
      %500 = vmatprep.subr.mxu0 0.0
      %501 = vmatpush1.msra.mxu0 0.0
      %502 = vmatprep.subr.mxu0 0.0
      %503 = vmatpush1.msra.mxu0 0.0
      %504 = vmatprep.subr.mxu0 0.0
      %505 = vmatpush1.msra.mxu0 0.0
      %506 = vmatprep.subr.mxu0 0.0
      %507 = vmatpush1.msra.mxu0 0.0
      %508 = vmatprep.subr.mxu0 0.0
      %509 = vmatpush1.msra.mxu0 0.0
      %510 = vmatprep.subr.mxu0 0.0
      %511 = vmatpush1.msra.mxu0 0.0
      %512 = vmatprep.mubr.f32.mxu0 0.0
      %513 = vmatmul.mubr.f32.gmra.mrb[0].mxu0 %v446
      %v514 = vpop.f32.mrb[0].mxu0
      %v515 = vadd.f32 %v371, %v514
      %v516 = vpop.f32.mrb[0].mxu0
      %v517 = vadd.f32 %v373, %v516
      %518 = vdwg.mxu0
      %519 = vmatprep.subr.mxu0 0.0
      %520 = vmatpush1.msra.mxu0 %v287
      %521 = vmatprep.subr.mxu0 0.0
      %522 = vmatpush1.msra.mxu0 0.0
      %523 = vmatprep.subr.mxu0 0.0
      %524 = vmatpush1.msra.mxu0 0.0
      %525 = vmatprep.subr.mxu0 0.0
      %526 = vmatpush1.msra.mxu0 0.0
      %527 = vmatprep.subr.mxu0 0.0
      %528 = vmatpush1.msra.mxu0 0.0
      %529 = vmatprep.subr.mxu0 0.0
      %530 = vmatpush1.msra.mxu0 0.0
      %531 = vmatprep.subr.mxu0 0.0
      %532 = vmatpush1.msra.mxu0 0.0
      %533 = vmatprep.subr.mxu0 0.0
      %534 = vmatpush1.msra.mxu0 0.0
      %535 = vmatprep.subr.mxu0 0.0
      %536 = vmatpush1.msra.mxu0 0.0
      %537 = vmatprep.subr.mxu0 0.0
      %538 = vmatpush1.msra.mxu0 0.0
      %539 = vmatprep.subr.mxu0 0.0
      %540 = vmatpush1.msra.mxu0 0.0
      %541 = vmatprep.subr.mxu0 0.0
      %542 = vmatpush1.msra.mxu0 0.0
      %543 = vmatprep.subr.mxu0 0.0
      %544 = vmatpush1.msra.mxu0 0.0
      %545 = vmatprep.subr.mxu0 0.0
      %546 = vmatpush1.msra.mxu0 0.0
      %547 = vmatprep.subr.mxu0 0.0
      %548 = vmatpush1.msra.mxu0 0.0
      %549 = vmatprep.subr.mxu0 0.0
      %550 = vmatpush1.msra.mxu0 0.0
      %551 = vmatprep.subr.mxu0 0.0
      %552 = vmatpush1.msra.mxu0 0.0
      %553 = vmatprep.subr.mxu0 0.0
      %554 = vmatpush1.msra.mxu0 0.0
      %555 = vmatprep.subr.mxu0 0.0
      %556 = vmatpush1.msra.mxu0 0.0
      %557 = vmatprep.subr.mxu0 0.0
      %558 = vmatpush1.msra.mxu0 0.0
      %559 = vmatprep.subr.mxu0 0.0
      %560 = vmatpush1.msra.mxu0 0.0
      %561 = vmatprep.subr.mxu0 0.0
      %562 = vmatpush1.msra.mxu0 0.0
      %563 = vmatprep.subr.mxu0 0.0
      %564 = vmatpush1.msra.mxu0 0.0
      %565 = vmatprep.subr.mxu0 0.0
      %566 = vmatpush1.msra.mxu0 0.0
      %567 = vmatprep.subr.mxu0 0.0
      %568 = vmatpush1.msra.mxu0 0.0
      %569 = vmatprep.subr.mxu0 0.0
      %570 = vmatpush1.msra.mxu0 0.0
      %571 = vmatprep.subr.mxu0 0.0
      %572 = vmatpush1.msra.mxu0 0.0
      %573 = vmatprep.subr.mxu0 0.0
      %574 = vmatpush1.msra.mxu0 0.0
      %575 = vmatprep.subr.mxu0 0.0
      %576 = vmatpush1.msra.mxu0 0.0
      %577 = vmatprep.subr.mxu0 0.0
      %578 = vmatpush1.msra.mxu0 0.0
      %579 = vmatprep.subr.mxu0 0.0
      %580 = vmatpush1.msra.mxu0 0.0
      %581 = vmatprep.subr.mxu0 0.0
      %582 = vmatpush1.msra.mxu0 0.0
      %583 = vmatprep.mubr.f32.mxu0 0.0
      %584 = vmatmul.mubr.f32.gmra.mrb[0].mxu0 %v446
      %v585 = vpop.f32.mrb[0].mxu0
      %v586 = vadd.f32 %v442, %v585
      %v587 = vpop.f32.mrb[0].mxu0
      %588 = vdwg.mxu0
      %589 = vrot.lane.b32.xlu0 %v275, 17
      %v590 = vpop.permute.xlu0 %589
      %591 = vrot.lane.b32.xlu0 %v276, 17
      %v592 = vpop.permute.xlu0 %591
      %593 = vrot.lane.b32.xlu0 %v277, 17
      %v594 = vpop.permute.xlu0 %593
      %vm595 = vcmp.lt.s32.totalorder %v285, 17
      %v596 = vsel %vm595, %v592, %v594
      %v597 = vsel %vm595, %v590, %v592
      %v598 = vsel %vm595, %v594, %v590
      %v600 = vsel %vm300, %v230, 0
      %602 = vmatprep.subr.mxu0 %v597
      %603 = vmatpush1.msra.mxu0 %v598
      %604 = vmatprep.subr.mxu0 0.0
      %605 = vmatpush1.msra.mxu0 0.0
      %606 = vmatprep.subr.mxu0 0.0
      %607 = vmatpush1.msra.mxu0 0.0
      %608 = vmatprep.subr.mxu0 0.0
      %609 = vmatpush1.msra.mxu0 0.0
      %610 = vmatprep.subr.mxu0 0.0
      %611 = vmatpush1.msra.mxu0 0.0
      %612 = vmatprep.subr.mxu0 0.0
      %613 = vmatpush1.msra.mxu0 0.0
      %614 = vmatprep.subr.mxu0 0.0
      %615 = vmatpush1.msra.mxu0 0.0
      %616 = vmatprep.subr.mxu0 0.0
      %617 = vmatpush1.msra.mxu0 0.0
      %618 = vmatprep.subr.mxu0 0.0
      %619 = vmatpush1.msra.mxu0 0.0
      %620 = vmatprep.subr.mxu0 0.0
      %621 = vmatpush1.msra.mxu0 0.0
      %622 = vmatprep.subr.mxu0 0.0
      %623 = vmatpush1.msra.mxu0 0.0
      %624 = vmatprep.subr.mxu0 0.0
      %625 = vmatpush1.msra.mxu0 0.0
      %626 = vmatprep.subr.mxu0 0.0
      %627 = vmatpush1.msra.mxu0 0.0
      %628 = vmatprep.subr.mxu0 0.0
      %629 = vmatpush1.msra.mxu0 0.0
      %630 = vmatprep.subr.mxu0 0.0
      %631 = vmatpush1.msra.mxu0 0.0
      %632 = vmatprep.subr.mxu0 0.0
      %633 = vmatpush1.msra.mxu0 0.0
      %634 = vmatprep.subr.mxu0 0.0
      %635 = vmatpush1.msra.mxu0 0.0
      %636 = vmatprep.subr.mxu0 0.0
      %637 = vmatpush1.msra.mxu0 0.0
      %638 = vmatprep.subr.mxu0 0.0
      %639 = vmatpush1.msra.mxu0 0.0
      %640 = vmatprep.subr.mxu0 0.0
      %641 = vmatpush1.msra.mxu0 0.0
      %642 = vmatprep.subr.mxu0 0.0
      %643 = vmatpush1.msra.mxu0 0.0
      %644 = vmatprep.subr.mxu0 0.0
      %645 = vmatpush1.msra.mxu0 0.0
      %646 = vmatprep.subr.mxu0 0.0
      %647 = vmatpush1.msra.mxu0 0.0
      %648 = vmatprep.subr.mxu0 0.0
      %649 = vmatpush1.msra.mxu0 0.0
      %650 = vmatprep.subr.mxu0 0.0
      %651 = vmatpush1.msra.mxu0 0.0
      %652 = vmatprep.subr.mxu0 0.0
      %653 = vmatpush1.msra.mxu0 0.0
      %654 = vmatprep.subr.mxu0 0.0
      %655 = vmatpush1.msra.mxu0 0.0
      %656 = vmatprep.subr.mxu0 0.0
      %657 = vmatpush1.msra.mxu0 0.0
      %658 = vmatprep.subr.mxu0 0.0
      %659 = vmatpush1.msra.mxu0 0.0
      %660 = vmatprep.subr.mxu0 0.0
      %661 = vmatpush1.msra.mxu0 0.0
      %662 = vmatprep.subr.mxu0 0.0
      %663 = vmatpush1.msra.mxu0 0.0
      %664 = vmatprep.subr.mxu0 0.0
      %665 = vmatpush1.msra.mxu0 0.0
      %666 = vmatprep.mubr.f32.mxu0 0.0
      %667 = vmatmul.mubr.f32.gmra.mrb[0].mxu0 %v600
      %v668 = vpop.f32.mrb[0].mxu0
      %v669 = vadd.f32 0.0, %v668
      %v670 = vpop.f32.mrb[0].mxu0
      %v671 = vadd.f32 0.0, %v670
      %672 = vdwg.mxu0
      %673 = vmatprep.subr.mxu0 0.0
      %674 = vmatpush1.msra.mxu0 %v596
      %675 = vmatprep.subr.mxu0 0.0
      %676 = vmatpush1.msra.mxu0 0.0
      %677 = vmatprep.subr.mxu0 0.0
      %678 = vmatpush1.msra.mxu0 0.0
      %679 = vmatprep.subr.mxu0 0.0
      %680 = vmatpush1.msra.mxu0 0.0
      %681 = vmatprep.subr.mxu0 0.0
      %682 = vmatpush1.msra.mxu0 0.0
      %683 = vmatprep.subr.mxu0 0.0
      %684 = vmatpush1.msra.mxu0 0.0
      %685 = vmatprep.subr.mxu0 0.0
      %686 = vmatpush1.msra.mxu0 0.0
      %687 = vmatprep.subr.mxu0 0.0
      %688 = vmatpush1.msra.mxu0 0.0
      %689 = vmatprep.subr.mxu0 0.0
      %690 = vmatpush1.msra.mxu0 0.0
      %691 = vmatprep.subr.mxu0 0.0
      %692 = vmatpush1.msra.mxu0 0.0
      %693 = vmatprep.subr.mxu0 0.0
      %694 = vmatpush1.msra.mxu0 0.0
      %695 = vmatprep.subr.mxu0 0.0
      %696 = vmatpush1.msra.mxu0 0.0
      %697 = vmatprep.subr.mxu0 0.0
      %698 = vmatpush1.msra.mxu0 0.0
      %699 = vmatprep.subr.mxu0 0.0
      %700 = vmatpush1.msra.mxu0 0.0
      %701 = vmatprep.subr.mxu0 0.0
      %702 = vmatpush1.msra.mxu0 0.0
      %703 = vmatprep.subr.mxu0 0.0
      %704 = vmatpush1.msra.mxu0 0.0
      %705 = vmatprep.subr.mxu0 0.0
      %706 = vmatpush1.msra.mxu0 0.0
      %707 = vmatprep.subr.mxu0 0.0
      %708 = vmatpush1.msra.mxu0 0.0
      %709 = vmatprep.subr.mxu0 0.0
      %710 = vmatpush1.msra.mxu0 0.0
      %711 = vmatprep.subr.mxu0 0.0
      %712 = vmatpush1.msra.mxu0 0.0
      %713 = vmatprep.subr.mxu0 0.0
      %714 = vmatpush1.msra.mxu0 0.0
      %715 = vmatprep.subr.mxu0 0.0
      %716 = vmatpush1.msra.mxu0 0.0
      %717 = vmatprep.subr.mxu0 0.0
      %718 = vmatpush1.msra.mxu0 0.0
      %719 = vmatprep.subr.mxu0 0.0
      %720 = vmatpush1.msra.mxu0 0.0
      %721 = vmatprep.subr.mxu0 0.0
      %722 = vmatpush1.msra.mxu0 0.0
      %723 = vmatprep.subr.mxu0 0.0
      %724 = vmatpush1.msra.mxu0 0.0
      %725 = vmatprep.subr.mxu0 0.0
      %726 = vmatpush1.msra.mxu0 0.0
      %727 = vmatprep.subr.mxu0 0.0
      %728 = vmatpush1.msra.mxu0 0.0
      %729 = vmatprep.subr.mxu0 0.0
      %730 = vmatpush1.msra.mxu0 0.0
      %731 = vmatprep.subr.mxu0 0.0
      %732 = vmatpush1.msra.mxu0 0.0
      %733 = vmatprep.subr.mxu0 0.0
      %734 = vmatpush1.msra.mxu0 0.0
      %735 = vmatprep.subr.mxu0 0.0
      %736 = vmatpush1.msra.mxu0 0.0
      %737 = vmatprep.mubr.f32.mxu0 0.0
      %738 = vmatmul.mubr.f32.gmra.mrb[0].mxu0 %v600
      %v739 = vpop.f32.mrb[0].mxu0
      %v740 = vadd.f32 0.0, %v739
      %v741 = vpop.f32.mrb[0].mxu0
      %742 = vdwg.mxu0
      %v743 = vadd.f32 %v515, %v669
      %v744 = vadd.f32 %v517, %v671
      %v745 = vadd.f32 %v586, %v740
      %746 = vrot.lane.b32.xlu0 %v275, 1
      %v747 = vpop.permute.xlu0 %746
      %748 = vrot.lane.b32.xlu0 %v276, 1
      %v749 = vpop.permute.xlu0 %748
      %750 = vrot.lane.b32.xlu0 %v277, 1
      %v751 = vpop.permute.xlu0 %750
      %vm752 = vcmp.lt.s32.totalorder %v285, 1
      %v753 = vsel %vm752, %v749, %v751
      %v754 = vsel %vm752, %v747, %v749
      %v755 = vsel %vm752, %v751, %v747
      %v757 = vsel %vm300, %v231, 0
      %759 = vmatprep.subr.mxu0 %v754
      %760 = vmatpush1.msra.mxu0 %v755
      %761 = vmatprep.subr.mxu0 0.0
      %762 = vmatpush1.msra.mxu0 0.0
      %763 = vmatprep.subr.mxu0 0.0
      %764 = vmatpush1.msra.mxu0 0.0
      %765 = vmatprep.subr.mxu0 0.0
      %766 = vmatpush1.msra.mxu0 0.0
      %767 = vmatprep.subr.mxu0 0.0
      %768 = vmatpush1.msra.mxu0 0.0
      %769 = vmatprep.subr.mxu0 0.0
      %770 = vmatpush1.msra.mxu0 0.0
      %771 = vmatprep.subr.mxu0 0.0
      %772 = vmatpush1.msra.mxu0 0.0
      %773 = vmatprep.subr.mxu0 0.0
      %774 = vmatpush1.msra.mxu0 0.0
      %775 = vmatprep.subr.mxu0 0.0
      %776 = vmatpush1.msra.mxu0 0.0
      %777 = vmatprep.subr.mxu0 0.0
      %778 = vmatpush1.msra.mxu0 0.0
      %779 = vmatprep.subr.mxu0 0.0
      %780 = vmatpush1.msra.mxu0 0.0
      %781 = vmatprep.subr.mxu0 0.0
      %782 = vmatpush1.msra.mxu0 0.0
      %783 = vmatprep.subr.mxu0 0.0
      %784 = vmatpush1.msra.mxu0 0.0
      %785 = vmatprep.subr.mxu0 0.0
      %786 = vmatpush1.msra.mxu0 0.0
      %787 = vmatprep.subr.mxu0 0.0
      %788 = vmatpush1.msra.mxu0 0.0
      %789 = vmatprep.subr.mxu0 0.0
      %790 = vmatpush1.msra.mxu0 0.0
      %791 = vmatprep.subr.mxu0 0.0
      %792 = vmatpush1.msra.mxu0 0.0
      %793 = vmatprep.subr.mxu0 0.0
      %794 = vmatpush1.msra.mxu0 0.0
      %795 = vmatprep.subr.mxu0 0.0
      %796 = vmatpush1.msra.mxu0 0.0
      %797 = vmatprep.subr.mxu0 0.0
      %798 = vmatpush1.msra.mxu0 0.0
      %799 = vmatprep.subr.mxu0 0.0
      %800 = vmatpush1.msra.mxu0 0.0
      %801 = vmatprep.subr.mxu0 0.0
      %802 = vmatpush1.msra.mxu0 0.0
      %803 = vmatprep.subr.mxu0 0.0
      %804 = vmatpush1.msra.mxu0 0.0
      %805 = vmatprep.subr.mxu0 0.0
      %806 = vmatpush1.msra.mxu0 0.0
      %807 = vmatprep.subr.mxu0 0.0
      %808 = vmatpush1.msra.mxu0 0.0
      %809 = vmatprep.subr.mxu0 0.0
      %810 = vmatpush1.msra.mxu0 0.0
      %811 = vmatprep.subr.mxu0 0.0
      %812 = vmatpush1.msra.mxu0 0.0
      %813 = vmatprep.subr.mxu0 0.0
      %814 = vmatpush1.msra.mxu0 0.0
      %815 = vmatprep.subr.mxu0 0.0
      %816 = vmatpush1.msra.mxu0 0.0
      %817 = vmatprep.subr.mxu0 0.0
      %818 = vmatpush1.msra.mxu0 0.0
      %819 = vmatprep.subr.mxu0 0.0
      %820 = vmatpush1.msra.mxu0 0.0
      %821 = vmatprep.subr.mxu0 0.0
      %822 = vmatpush1.msra.mxu0 0.0
      %823 = vmatprep.mubr.f32.mxu0 0.0
      %824 = vmatmul.mubr.f32.gmra.mrb[0].mxu0 %v757
      %v825 = vpop.f32.mrb[0].mxu0
      %v826 = vadd.f32 0.0, %v825
      %v827 = vpop.f32.mrb[0].mxu0
      %v828 = vadd.f32 0.0, %v827
      %829 = vdwg.mxu0
      %830 = vmatprep.subr.mxu0 0.0
      %831 = vmatpush1.msra.mxu0 %v753
      %832 = vmatprep.subr.mxu0 0.0
      %833 = vmatpush1.msra.mxu0 0.0
      %834 = vmatprep.subr.mxu0 0.0
      %835 = vmatpush1.msra.mxu0 0.0
      %836 = vmatprep.subr.mxu0 0.0
      %837 = vmatpush1.msra.mxu0 0.0
      %838 = vmatprep.subr.mxu0 0.0
      %839 = vmatpush1.msra.mxu0 0.0
      %840 = vmatprep.subr.mxu0 0.0
      %841 = vmatpush1.msra.mxu0 0.0
      %842 = vmatprep.subr.mxu0 0.0
      %843 = vmatpush1.msra.mxu0 0.0
      %844 = vmatprep.subr.mxu0 0.0
      %845 = vmatpush1.msra.mxu0 0.0
      %846 = vmatprep.subr.mxu0 0.0
      %847 = vmatpush1.msra.mxu0 0.0
      %848 = vmatprep.subr.mxu0 0.0
      %849 = vmatpush1.msra.mxu0 0.0
      %850 = vmatprep.subr.mxu0 0.0
      %851 = vmatpush1.msra.mxu0 0.0
      %852 = vmatprep.subr.mxu0 0.0
      %853 = vmatpush1.msra.mxu0 0.0
      %854 = vmatprep.subr.mxu0 0.0
      %855 = vmatpush1.msra.mxu0 0.0
      %856 = vmatprep.subr.mxu0 0.0
      %857 = vmatpush1.msra.mxu0 0.0
      %858 = vmatprep.subr.mxu0 0.0
      %859 = vmatpush1.msra.mxu0 0.0
      %860 = vmatprep.subr.mxu0 0.0
      %861 = vmatpush1.msra.mxu0 0.0
      %862 = vmatprep.subr.mxu0 0.0
      %863 = vmatpush1.msra.mxu0 0.0
      %864 = vmatprep.subr.mxu0 0.0
      %865 = vmatpush1.msra.mxu0 0.0
      %866 = vmatprep.subr.mxu0 0.0
      %867 = vmatpush1.msra.mxu0 0.0
      %868 = vmatprep.subr.mxu0 0.0
      %869 = vmatpush1.msra.mxu0 0.0
      %870 = vmatprep.subr.mxu0 0.0
      %871 = vmatpush1.msra.mxu0 0.0
      %872 = vmatprep.subr.mxu0 0.0
      %873 = vmatpush1.msra.mxu0 0.0
      %874 = vmatprep.subr.mxu0 0.0
      %875 = vmatpush1.msra.mxu0 0.0
      %876 = vmatprep.subr.mxu0 0.0
      %877 = vmatpush1.msra.mxu0 0.0
      %878 = vmatprep.subr.mxu0 0.0
      %879 = vmatpush1.msra.mxu0 0.0
      %880 = vmatprep.subr.mxu0 0.0
      %881 = vmatpush1.msra.mxu0 0.0
      %882 = vmatprep.subr.mxu0 0.0
      %883 = vmatpush1.msra.mxu0 0.0
      %884 = vmatprep.subr.mxu0 0.0
      %885 = vmatpush1.msra.mxu0 0.0
      %886 = vmatprep.subr.mxu0 0.0
      %887 = vmatpush1.msra.mxu0 0.0
      %888 = vmatprep.subr.mxu0 0.0
      %889 = vmatpush1.msra.mxu0 0.0
      %890 = vmatprep.subr.mxu0 0.0
      %891 = vmatpush1.msra.mxu0 0.0
      %892 = vmatprep.subr.mxu0 0.0
      %893 = vmatpush1.msra.mxu0 0.0
      %894 = vmatprep.mubr.f32.mxu0 0.0
      %895 = vmatmul.mubr.f32.gmra.mrb[0].mxu0 %v757
      %v896 = vpop.f32.mrb[0].mxu0
      %v897 = vadd.f32 0.0, %v896
      %v898 = vpop.f32.mrb[0].mxu0
      %899 = vdwg.mxu0
      %v900 = vadd.f32 %v743, %v826
      %v901 = vadd.f32 %v744, %v828
      %v902 = vadd.f32 %v745, %v897
      %v904 = vsel %vm300, %v232, 0
      %906 = vmatprep.subr.mxu0 %v276
      %907 = vmatpush1.msra.mxu0 %v275
      %908 = vmatprep.subr.mxu0 0.0
      %909 = vmatpush1.msra.mxu0 0.0
      %910 = vmatprep.subr.mxu0 0.0
      %911 = vmatpush1.msra.mxu0 0.0
      %912 = vmatprep.subr.mxu0 0.0
      %913 = vmatpush1.msra.mxu0 0.0
      %914 = vmatprep.subr.mxu0 0.0
      %915 = vmatpush1.msra.mxu0 0.0
      %916 = vmatprep.subr.mxu0 0.0
      %917 = vmatpush1.msra.mxu0 0.0
      %918 = vmatprep.subr.mxu0 0.0
      %919 = vmatpush1.msra.mxu0 0.0
      %920 = vmatprep.subr.mxu0 0.0
      %921 = vmatpush1.msra.mxu0 0.0
      %922 = vmatprep.subr.mxu0 0.0
      %923 = vmatpush1.msra.mxu0 0.0
      %924 = vmatprep.subr.mxu0 0.0
      %925 = vmatpush1.msra.mxu0 0.0
      %926 = vmatprep.subr.mxu0 0.0
      %927 = vmatpush1.msra.mxu0 0.0
      %928 = vmatprep.subr.mxu0 0.0
      %929 = vmatpush1.msra.mxu0 0.0
      %930 = vmatprep.subr.mxu0 0.0
      %931 = vmatpush1.msra.mxu0 0.0
      %932 = vmatprep.subr.mxu0 0.0
      %933 = vmatpush1.msra.mxu0 0.0
      %934 = vmatprep.subr.mxu0 0.0
      %935 = vmatpush1.msra.mxu0 0.0
      %936 = vmatprep.subr.mxu0 0.0
      %937 = vmatpush1.msra.mxu0 0.0
      %938 = vmatprep.subr.mxu0 0.0
      %939 = vmatpush1.msra.mxu0 0.0
      %940 = vmatprep.subr.mxu0 0.0
      %941 = vmatpush1.msra.mxu0 0.0
      %942 = vmatprep.subr.mxu0 0.0
      %943 = vmatpush1.msra.mxu0 0.0
      %944 = vmatprep.subr.mxu0 0.0
      %945 = vmatpush1.msra.mxu0 0.0
      %946 = vmatprep.subr.mxu0 0.0
      %947 = vmatpush1.msra.mxu0 0.0
      %948 = vmatprep.subr.mxu0 0.0
      %949 = vmatpush1.msra.mxu0 0.0
      %950 = vmatprep.subr.mxu0 0.0
      %951 = vmatpush1.msra.mxu0 0.0
      %952 = vmatprep.subr.mxu0 0.0
      %953 = vmatpush1.msra.mxu0 0.0
      %954 = vmatprep.subr.mxu0 0.0
      %955 = vmatpush1.msra.mxu0 0.0
      %956 = vmatprep.subr.mxu0 0.0
      %957 = vmatpush1.msra.mxu0 0.0
      %958 = vmatprep.subr.mxu0 0.0
      %959 = vmatpush1.msra.mxu0 0.0
      %960 = vmatprep.subr.mxu0 0.0
      %961 = vmatpush1.msra.mxu0 0.0
      %962 = vmatprep.subr.mxu0 0.0
      %963 = vmatpush1.msra.mxu0 0.0
      %964 = vmatprep.subr.mxu0 0.0
      %965 = vmatpush1.msra.mxu0 0.0
      %966 = vmatprep.subr.mxu0 0.0
      %967 = vmatpush1.msra.mxu0 0.0
      %968 = vmatprep.subr.mxu0 0.0
      %969 = vmatpush1.msra.mxu0 0.0
      %970 = vmatprep.mubr.f32.mxu0 0.0
      %971 = vmatmul.mubr.f32.gmra.mrb[0].mxu0 %v904
      %v972 = vpop.f32.mrb[0].mxu0
      %v973 = vadd.f32 0.0, %v972
      %v974 = vpop.f32.mrb[0].mxu0
      %v975 = vadd.f32 0.0, %v974
      %976 = vdwg.mxu0
      %977 = vmatprep.subr.mxu0 0.0
      %978 = vmatpush1.msra.mxu0 %v277
      %979 = vmatprep.subr.mxu0 0.0
      %980 = vmatpush1.msra.mxu0 0.0
      %981 = vmatprep.subr.mxu0 0.0
      %982 = vmatpush1.msra.mxu0 0.0
      %983 = vmatprep.subr.mxu0 0.0
      %984 = vmatpush1.msra.mxu0 0.0
      %985 = vmatprep.subr.mxu0 0.0
      %986 = vmatpush1.msra.mxu0 0.0
      %987 = vmatprep.subr.mxu0 0.0
      %988 = vmatpush1.msra.mxu0 0.0
      %989 = vmatprep.subr.mxu0 0.0
      %990 = vmatpush1.msra.mxu0 0.0
      %991 = vmatprep.subr.mxu0 0.0
      %992 = vmatpush1.msra.mxu0 0.0
      %993 = vmatprep.subr.mxu0 0.0
      %994 = vmatpush1.msra.mxu0 0.0
      %995 = vmatprep.subr.mxu0 0.0
      %996 = vmatpush1.msra.mxu0 0.0
      %997 = vmatprep.subr.mxu0 0.0
      %998 = vmatpush1.msra.mxu0 0.0
      %999 = vmatprep.subr.mxu0 0.0
      %1000 = vmatpush1.msra.mxu0 0.0
      %1001 = vmatprep.subr.mxu0 0.0
      %1002 = vmatpush1.msra.mxu0 0.0
      %1003 = vmatprep.subr.mxu0 0.0
      %1004 = vmatpush1.msra.mxu0 0.0
      %1005 = vmatprep.subr.mxu0 0.0
      %1006 = vmatpush1.msra.mxu0 0.0
      %1007 = vmatprep.subr.mxu0 0.0
      %1008 = vmatpush1.msra.mxu0 0.0
      %1009 = vmatprep.subr.mxu0 0.0
      %1010 = vmatpush1.msra.mxu0 0.0
      %1011 = vmatprep.subr.mxu0 0.0
      %1012 = vmatpush1.msra.mxu0 0.0
      %1013 = vmatprep.subr.mxu0 0.0
      %1014 = vmatpush1.msra.mxu0 0.0
      %1015 = vmatprep.subr.mxu0 0.0
      %1016 = vmatpush1.msra.mxu0 0.0
      %1017 = vmatprep.subr.mxu0 0.0
      %1018 = vmatpush1.msra.mxu0 0.0
      %1019 = vmatprep.subr.mxu0 0.0
      %1020 = vmatpush1.msra.mxu0 0.0
      %1021 = vmatprep.subr.mxu0 0.0
      %1022 = vmatpush1.msra.mxu0 0.0
      %1023 = vmatprep.subr.mxu0 0.0
      %1024 = vmatpush1.msra.mxu0 0.0
      %1025 = vmatprep.subr.mxu0 0.0
      %1026 = vmatpush1.msra.mxu0 0.0
      %1027 = vmatprep.subr.mxu0 0.0
      %1028 = vmatpush1.msra.mxu0 0.0
      %1029 = vmatprep.subr.mxu0 0.0
      %1030 = vmatpush1.msra.mxu0 0.0
      %1031 = vmatprep.subr.mxu0 0.0
      %1032 = vmatpush1.msra.mxu0 0.0
      %1033 = vmatprep.subr.mxu0 0.0
      %1034 = vmatpush1.msra.mxu0 0.0
      %1035 = vmatprep.subr.mxu0 0.0
      %1036 = vmatpush1.msra.mxu0 0.0
      %1037 = vmatprep.subr.mxu0 0.0
      %1038 = vmatpush1.msra.mxu0 0.0
      %1039 = vmatprep.subr.mxu0 0.0
      %1040 = vmatpush1.msra.mxu0 0.0
      %1041 = vmatprep.mubr.f32.mxu0 0.0
      %1042 = vmatmul.mubr.f32.gmra.mrb[0].mxu0 %v904
      %v1043 = vpop.f32.mrb[0].mxu0
      %v1044 = vadd.f32 0.0, %v1043
      %v1045 = vpop.f32.mrb[0].mxu0
      %1046 = vdwg.mxu0
      %v1047 = vadd.f32 %v900, %v973
      %v1048 = vadd.f32 %v901, %v975
      %v1049 = vadd.f32 %v902, %v1044
      %1050 = vrot.lane.b32.xlu0 %v275, 127
      %v1051 = vpop.permute.xlu0 %1050
      %1052 = vrot.lane.b32.xlu0 %v276, 127
      %v1053 = vpop.permute.xlu0 %1052
      %1054 = vrot.lane.b32.xlu0 %v277, 127
      %v1055 = vpop.permute.xlu0 %1054
      %vm1056 = vcmp.lt.s32.totalorder %v285, 127
      %v1057 = vsel %vm1056, %v1053, %v1055
      %v1058 = vsel %vm1056, %v1051, %v1053
      %v1059 = vsel %vm1056, %v1055, %v1051
      %v1061 = vsel %vm300, %v233, 0
      %1063 = vmatprep.subr.mxu0 %v1057
      %1064 = vmatpush1.msra.mxu0 %v1058
      %1065 = vmatprep.subr.mxu0 0.0
      %1066 = vmatpush1.msra.mxu0 0.0
      %1067 = vmatprep.subr.mxu0 0.0
      %1068 = vmatpush1.msra.mxu0 0.0
      %1069 = vmatprep.subr.mxu0 0.0
      %1070 = vmatpush1.msra.mxu0 0.0
      %1071 = vmatprep.subr.mxu0 0.0
      %1072 = vmatpush1.msra.mxu0 0.0
      %1073 = vmatprep.subr.mxu0 0.0
      %1074 = vmatpush1.msra.mxu0 0.0
      %1075 = vmatprep.subr.mxu0 0.0
      %1076 = vmatpush1.msra.mxu0 0.0
      %1077 = vmatprep.subr.mxu0 0.0
      %1078 = vmatpush1.msra.mxu0 0.0
      %1079 = vmatprep.subr.mxu0 0.0
      %1080 = vmatpush1.msra.mxu0 0.0
      %1081 = vmatprep.subr.mxu0 0.0
      %1082 = vmatpush1.msra.mxu0 0.0
      %1083 = vmatprep.subr.mxu0 0.0
      %1084 = vmatpush1.msra.mxu0 0.0
      %1085 = vmatprep.subr.mxu0 0.0
      %1086 = vmatpush1.msra.mxu0 0.0
      %1087 = vmatprep.subr.mxu0 0.0
      %1088 = vmatpush1.msra.mxu0 0.0
      %1089 = vmatprep.subr.mxu0 0.0
      %1090 = vmatpush1.msra.mxu0 0.0
      %1091 = vmatprep.subr.mxu0 0.0
      %1092 = vmatpush1.msra.mxu0 0.0
      %1093 = vmatprep.subr.mxu0 0.0
      %1094 = vmatpush1.msra.mxu0 0.0
      %1095 = vmatprep.subr.mxu0 0.0
      %1096 = vmatpush1.msra.mxu0 0.0
      %1097 = vmatprep.subr.mxu0 0.0
      %1098 = vmatpush1.msra.mxu0 0.0
      %1099 = vmatprep.subr.mxu0 0.0
      %1100 = vmatpush1.msra.mxu0 0.0
      %1101 = vmatprep.subr.mxu0 0.0
      %1102 = vmatpush1.msra.mxu0 0.0
      %1103 = vmatprep.subr.mxu0 0.0
      %1104 = vmatpush1.msra.mxu0 0.0
      %1105 = vmatprep.subr.mxu0 0.0
      %1106 = vmatpush1.msra.mxu0 0.0
      %1107 = vmatprep.subr.mxu0 0.0
      %1108 = vmatpush1.msra.mxu0 0.0
      %1109 = vmatprep.subr.mxu0 0.0
      %1110 = vmatpush1.msra.mxu0 0.0
      %1111 = vmatprep.subr.mxu0 0.0
      %1112 = vmatpush1.msra.mxu0 0.0
      %1113 = vmatprep.subr.mxu0 0.0
      %1114 = vmatpush1.msra.mxu0 0.0
      %1115 = vmatprep.subr.mxu0 0.0
      %1116 = vmatpush1.msra.mxu0 0.0
      %1117 = vmatprep.subr.mxu0 0.0
      %1118 = vmatpush1.msra.mxu0 0.0
      %1119 = vmatprep.subr.mxu0 0.0
      %1120 = vmatpush1.msra.mxu0 0.0
      %1121 = vmatprep.subr.mxu0 0.0
      %1122 = vmatpush1.msra.mxu0 0.0
      %1123 = vmatprep.subr.mxu0 0.0
      %1124 = vmatpush1.msra.mxu0 0.0
      %1125 = vmatprep.subr.mxu0 0.0
      %1126 = vmatpush1.msra.mxu0 0.0
      %1127 = vmatprep.mubr.f32.mxu0 0.0
      %1128 = vmatmul.mubr.f32.gmra.mrb[0].mxu0 %v1061
      %v1129 = vpop.f32.mrb[0].mxu0
      %v1130 = vadd.f32 0.0, %v1129
      %v1131 = vpop.f32.mrb[0].mxu0
      %v1132 = vadd.f32 0.0, %v1131
      %1133 = vdwg.mxu0
      %1134 = vmatprep.subr.mxu0 0.0
      %1135 = vmatpush1.msra.mxu0 %v1059
      %1136 = vmatprep.subr.mxu0 0.0
      %1137 = vmatpush1.msra.mxu0 0.0
      %1138 = vmatprep.subr.mxu0 0.0
      %1139 = vmatpush1.msra.mxu0 0.0
      %1140 = vmatprep.subr.mxu0 0.0
      %1141 = vmatpush1.msra.mxu0 0.0
      %1142 = vmatprep.subr.mxu0 0.0
      %1143 = vmatpush1.msra.mxu0 0.0
      %1144 = vmatprep.subr.mxu0 0.0
      %1145 = vmatpush1.msra.mxu0 0.0
      %1146 = vmatprep.subr.mxu0 0.0
      %1147 = vmatpush1.msra.mxu0 0.0
      %1148 = vmatprep.subr.mxu0 0.0
      %1149 = vmatpush1.msra.mxu0 0.0
      %1150 = vmatprep.subr.mxu0 0.0
      %1151 = vmatpush1.msra.mxu0 0.0
      %1152 = vmatprep.subr.mxu0 0.0
      %1153 = vmatpush1.msra.mxu0 0.0
      %1154 = vmatprep.subr.mxu0 0.0
      %1155 = vmatpush1.msra.mxu0 0.0
      %1156 = vmatprep.subr.mxu0 0.0
      %1157 = vmatpush1.msra.mxu0 0.0
      %1158 = vmatprep.subr.mxu0 0.0
      %1159 = vmatpush1.msra.mxu0 0.0
      %1160 = vmatprep.subr.mxu0 0.0
      %1161 = vmatpush1.msra.mxu0 0.0
      %1162 = vmatprep.subr.mxu0 0.0
      %1163 = vmatpush1.msra.mxu0 0.0
      %1164 = vmatprep.subr.mxu0 0.0
      %1165 = vmatpush1.msra.mxu0 0.0
      %1166 = vmatprep.subr.mxu0 0.0
      %1167 = vmatpush1.msra.mxu0 0.0
      %1168 = vmatprep.subr.mxu0 0.0
      %1169 = vmatpush1.msra.mxu0 0.0
      %1170 = vmatprep.subr.mxu0 0.0
      %1171 = vmatpush1.msra.mxu0 0.0
      %1172 = vmatprep.subr.mxu0 0.0
      %1173 = vmatpush1.msra.mxu0 0.0
      %1174 = vmatprep.subr.mxu0 0.0
      %1175 = vmatpush1.msra.mxu0 0.0
      %1176 = vmatprep.subr.mxu0 0.0
      %1177 = vmatpush1.msra.mxu0 0.0
      %1178 = vmatprep.subr.mxu0 0.0
      %1179 = vmatpush1.msra.mxu0 0.0
      %1180 = vmatprep.subr.mxu0 0.0
      %1181 = vmatpush1.msra.mxu0 0.0
      %1182 = vmatprep.subr.mxu0 0.0
      %1183 = vmatpush1.msra.mxu0 0.0
      %1184 = vmatprep.subr.mxu0 0.0
      %1185 = vmatpush1.msra.mxu0 0.0
      %1186 = vmatprep.subr.mxu0 0.0
      %1187 = vmatpush1.msra.mxu0 0.0
      %1188 = vmatprep.subr.mxu0 0.0
      %1189 = vmatpush1.msra.mxu0 0.0
      %1190 = vmatprep.subr.mxu0 0.0
      %1191 = vmatpush1.msra.mxu0 0.0
      %1192 = vmatprep.subr.mxu0 0.0
      %1193 = vmatpush1.msra.mxu0 0.0
      %1194 = vmatprep.subr.mxu0 0.0
      %1195 = vmatpush1.msra.mxu0 0.0
      %1196 = vmatprep.subr.mxu0 0.0
      %1197 = vmatpush1.msra.mxu0 0.0
      %1198 = vmatprep.mubr.f32.mxu0 0.0
      %1199 = vmatmul.mubr.f32.gmra.mrb[0].mxu0 %v1061
      %v1200 = vpop.f32.mrb[0].mxu0
      %v1201 = vadd.f32 0.0, %v1200
      %v1202 = vpop.f32.mrb[0].mxu0
      %1203 = vdwg.mxu0
      %v1204 = vadd.f32 %v1047, %v1130
      %v1205 = vadd.f32 %v1048, %v1132
      %v1206 = vadd.f32 %v1049, %v1201
      %1207 = vrot.lane.b32.xlu0 %v275, 111
      %v1208 = vpop.permute.xlu0 %1207
      %1209 = vrot.lane.b32.xlu0 %v276, 111
      %v1210 = vpop.permute.xlu0 %1209
      %1211 = vrot.lane.b32.xlu0 %v277, 111
      %v1212 = vpop.permute.xlu0 %1211
      %vm1213 = vcmp.lt.s32.totalorder %v285, 111
      %v1214 = vsel %vm1213, %v1210, %v1212
      %v1215 = vsel %vm1213, %v1208, %v1210
      %v1216 = vsel %vm1213, %v1212, %v1208
      %v1218 = vsel %vm300, %v234, 0
      %1220 = vmatprep.subr.mxu0 %v1214
      %1221 = vmatpush1.msra.mxu0 %v1215
      %1222 = vmatprep.subr.mxu0 0.0
      %1223 = vmatpush1.msra.mxu0 0.0
      %1224 = vmatprep.subr.mxu0 0.0
      %1225 = vmatpush1.msra.mxu0 0.0
      %1226 = vmatprep.subr.mxu0 0.0
      %1227 = vmatpush1.msra.mxu0 0.0
      %1228 = vmatprep.subr.mxu0 0.0
      %1229 = vmatpush1.msra.mxu0 0.0
      %1230 = vmatprep.subr.mxu0 0.0
      %1231 = vmatpush1.msra.mxu0 0.0
      %1232 = vmatprep.subr.mxu0 0.0
      %1233 = vmatpush1.msra.mxu0 0.0
      %1234 = vmatprep.subr.mxu0 0.0
      %1235 = vmatpush1.msra.mxu0 0.0
      %1236 = vmatprep.subr.mxu0 0.0
      %1237 = vmatpush1.msra.mxu0 0.0
      %1238 = vmatprep.subr.mxu0 0.0
      %1239 = vmatpush1.msra.mxu0 0.0
      %1240 = vmatprep.subr.mxu0 0.0
      %1241 = vmatpush1.msra.mxu0 0.0
      %1242 = vmatprep.subr.mxu0 0.0
      %1243 = vmatpush1.msra.mxu0 0.0
      %1244 = vmatprep.subr.mxu0 0.0
      %1245 = vmatpush1.msra.mxu0 0.0
      %1246 = vmatprep.subr.mxu0 0.0
      %1247 = vmatpush1.msra.mxu0 0.0
      %1248 = vmatprep.subr.mxu0 0.0
      %1249 = vmatpush1.msra.mxu0 0.0
      %1250 = vmatprep.subr.mxu0 0.0
      %1251 = vmatpush1.msra.mxu0 0.0
      %1252 = vmatprep.subr.mxu0 0.0
      %1253 = vmatpush1.msra.mxu0 0.0
      %1254 = vmatprep.subr.mxu0 0.0
      %1255 = vmatpush1.msra.mxu0 0.0
      %1256 = vmatprep.subr.mxu0 0.0
      %1257 = vmatpush1.msra.mxu0 0.0
      %1258 = vmatprep.subr.mxu0 0.0
      %1259 = vmatpush1.msra.mxu0 0.0
      %1260 = vmatprep.subr.mxu0 0.0
      %1261 = vmatpush1.msra.mxu0 0.0
      %1262 = vmatprep.subr.mxu0 0.0
      %1263 = vmatpush1.msra.mxu0 0.0
      %1264 = vmatprep.subr.mxu0 0.0
      %1265 = vmatpush1.msra.mxu0 0.0
      %1266 = vmatprep.subr.mxu0 0.0
      %1267 = vmatpush1.msra.mxu0 0.0
      %1268 = vmatprep.subr.mxu0 0.0
      %1269 = vmatpush1.msra.mxu0 0.0
      %1270 = vmatprep.subr.mxu0 0.0
      %1271 = vmatpush1.msra.mxu0 0.0
      %1272 = vmatprep.subr.mxu0 0.0
      %1273 = vmatpush1.msra.mxu0 0.0
      %1274 = vmatprep.subr.mxu0 0.0
      %1275 = vmatpush1.msra.mxu0 0.0
      %1276 = vmatprep.subr.mxu0 0.0
      %1277 = vmatpush1.msra.mxu0 0.0
      %1278 = vmatprep.subr.mxu0 0.0
      %1279 = vmatpush1.msra.mxu0 0.0
      %1280 = vmatprep.subr.mxu0 0.0
      %1281 = vmatpush1.msra.mxu0 0.0
      %1282 = vmatprep.subr.mxu0 0.0
      %1283 = vmatpush1.msra.mxu0 0.0
      %1284 = vmatprep.mubr.f32.mxu0 0.0
      %1285 = vmatmul.mubr.f32.gmra.mrb[0].mxu0 %v1218
      %v1286 = vpop.f32.mrb[0].mxu0
      %v1287 = vadd.f32 0.0, %v1286
      %v1288 = vpop.f32.mrb[0].mxu0
      %v1289 = vadd.f32 0.0, %v1288
      %1290 = vdwg.mxu0
      %1291 = vmatprep.subr.mxu0 0.0
      %1292 = vmatpush1.msra.mxu0 %v1216
      %1293 = vmatprep.subr.mxu0 0.0
      %1294 = vmatpush1.msra.mxu0 0.0
      %1295 = vmatprep.subr.mxu0 0.0
      %1296 = vmatpush1.msra.mxu0 0.0
      %1297 = vmatprep.subr.mxu0 0.0
      %1298 = vmatpush1.msra.mxu0 0.0
      %1299 = vmatprep.subr.mxu0 0.0
      %1300 = vmatpush1.msra.mxu0 0.0
      %1301 = vmatprep.subr.mxu0 0.0
      %1302 = vmatpush1.msra.mxu0 0.0
      %1303 = vmatprep.subr.mxu0 0.0
      %1304 = vmatpush1.msra.mxu0 0.0
      %1305 = vmatprep.subr.mxu0 0.0
      %1306 = vmatpush1.msra.mxu0 0.0
      %1307 = vmatprep.subr.mxu0 0.0
      %1308 = vmatpush1.msra.mxu0 0.0
      %1309 = vmatprep.subr.mxu0 0.0
      %1310 = vmatpush1.msra.mxu0 0.0
      %1311 = vmatprep.subr.mxu0 0.0
      %1312 = vmatpush1.msra.mxu0 0.0
      %1313 = vmatprep.subr.mxu0 0.0
      %1314 = vmatpush1.msra.mxu0 0.0
      %1315 = vmatprep.subr.mxu0 0.0
      %1316 = vmatpush1.msra.mxu0 0.0
      %1317 = vmatprep.subr.mxu0 0.0
      %1318 = vmatpush1.msra.mxu0 0.0
      %1319 = vmatprep.subr.mxu0 0.0
      %1320 = vmatpush1.msra.mxu0 0.0
      %1321 = vmatprep.subr.mxu0 0.0
      %1322 = vmatpush1.msra.mxu0 0.0
      %1323 = vmatprep.subr.mxu0 0.0
      %1324 = vmatpush1.msra.mxu0 0.0
      %1325 = vmatprep.subr.mxu0 0.0
      %1326 = vmatpush1.msra.mxu0 0.0
      %1327 = vmatprep.subr.mxu0 0.0
      %1328 = vmatpush1.msra.mxu0 0.0
      %1329 = vmatprep.subr.mxu0 0.0
      %1330 = vmatpush1.msra.mxu0 0.0
      %1331 = vmatprep.subr.mxu0 0.0
      %1332 = vmatpush1.msra.mxu0 0.0
      %1333 = vmatprep.subr.mxu0 0.0
      %1334 = vmatpush1.msra.mxu0 0.0
      %1335 = vmatprep.subr.mxu0 0.0
      %1336 = vmatpush1.msra.mxu0 0.0
      %1337 = vmatprep.subr.mxu0 0.0
      %1338 = vmatpush1.msra.mxu0 0.0
      %1339 = vmatprep.subr.mxu0 0.0
      %1340 = vmatpush1.msra.mxu0 0.0
      %1341 = vmatprep.subr.mxu0 0.0
      %1342 = vmatpush1.msra.mxu0 0.0
      %1343 = vmatprep.subr.mxu0 0.0
      %1344 = vmatpush1.msra.mxu0 0.0
      %1345 = vmatprep.subr.mxu0 0.0
      %1346 = vmatpush1.msra.mxu0 0.0
      %1347 = vmatprep.subr.mxu0 0.0
      %1348 = vmatpush1.msra.mxu0 0.0
      %1349 = vmatprep.subr.mxu0 0.0
      %1350 = vmatpush1.msra.mxu0 0.0
      %1351 = vmatprep.subr.mxu0 0.0
      %1352 = vmatpush1.msra.mxu0 0.0
      %1353 = vmatprep.subr.mxu0 0.0
      %1354 = vmatpush1.msra.mxu0 0.0
      %1355 = vmatprep.mubr.f32.mxu0 0.0
      %1356 = vmatmul.mubr.f32.gmra.mrb[0].mxu0 %v1218
      %v1357 = vpop.f32.mrb[0].mxu0
      %v1358 = vadd.f32 0.0, %v1357
      %v1359 = vpop.f32.mrb[0].mxu0
      %1360 = vdwg.mxu0
      %v1361 = vadd.f32 %v1204, %v1287
      %v1362 = vadd.f32 %v1205, %v1289
      %v1363 = vadd.f32 %v1206, %v1358
      %1364 = vrot.lane.b32.xlu0 %v275, 110
      %v1365 = vpop.permute.xlu0 %1364
      %1366 = vrot.lane.b32.xlu0 %v276, 110
      %v1367 = vpop.permute.xlu0 %1366
      %1368 = vrot.lane.b32.xlu0 %v277, 110
      %v1369 = vpop.permute.xlu0 %1368
      %vm1370 = vcmp.lt.s32.totalorder %v285, 110
      %v1371 = vsel %vm1370, %v1367, %v1369
      %v1372 = vsel %vm1370, %v1365, %v1367
      %v1373 = vsel %vm1370, %v1369, %v1365
      %v1375 = vsel %vm300, %v235, 0
      %1377 = vmatprep.subr.mxu0 %v1371
      %1378 = vmatpush1.msra.mxu0 %v1372
      %1379 = vmatprep.subr.mxu0 0.0
      %1380 = vmatpush1.msra.mxu0 0.0
      %1381 = vmatprep.subr.mxu0 0.0
      %1382 = vmatpush1.msra.mxu0 0.0
      %1383 = vmatprep.subr.mxu0 0.0
      %1384 = vmatpush1.msra.mxu0 0.0
      %1385 = vmatprep.subr.mxu0 0.0
      %1386 = vmatpush1.msra.mxu0 0.0
      %1387 = vmatprep.subr.mxu0 0.0
      %1388 = vmatpush1.msra.mxu0 0.0
      %1389 = vmatprep.subr.mxu0 0.0
      %1390 = vmatpush1.msra.mxu0 0.0
      %1391 = vmatprep.subr.mxu0 0.0
      %1392 = vmatpush1.msra.mxu0 0.0
      %1393 = vmatprep.subr.mxu0 0.0
      %1394 = vmatpush1.msra.mxu0 0.0
      %1395 = vmatprep.subr.mxu0 0.0
      %1396 = vmatpush1.msra.mxu0 0.0
      %1397 = vmatprep.subr.mxu0 0.0
      %1398 = vmatpush1.msra.mxu0 0.0
      %1399 = vmatprep.subr.mxu0 0.0
      %1400 = vmatpush1.msra.mxu0 0.0
      %1401 = vmatprep.subr.mxu0 0.0
      %1402 = vmatpush1.msra.mxu0 0.0
      %1403 = vmatprep.subr.mxu0 0.0
      %1404 = vmatpush1.msra.mxu0 0.0
      %1405 = vmatprep.subr.mxu0 0.0
      %1406 = vmatpush1.msra.mxu0 0.0
      %1407 = vmatprep.subr.mxu0 0.0
      %1408 = vmatpush1.msra.mxu0 0.0
      %1409 = vmatprep.subr.mxu0 0.0
      %1410 = vmatpush1.msra.mxu0 0.0
      %1411 = vmatprep.subr.mxu0 0.0
      %1412 = vmatpush1.msra.mxu0 0.0
      %1413 = vmatprep.subr.mxu0 0.0
      %1414 = vmatpush1.msra.mxu0 0.0
      %1415 = vmatprep.subr.mxu0 0.0
      %1416 = vmatpush1.msra.mxu0 0.0
      %1417 = vmatprep.subr.mxu0 0.0
      %1418 = vmatpush1.msra.mxu0 0.0
      %1419 = vmatprep.subr.mxu0 0.0
      %1420 = vmatpush1.msra.mxu0 0.0
      %1421 = vmatprep.subr.mxu0 0.0
      %1422 = vmatpush1.msra.mxu0 0.0
      %1423 = vmatprep.subr.mxu0 0.0
      %1424 = vmatpush1.msra.mxu0 0.0
      %1425 = vmatprep.subr.mxu0 0.0
      %1426 = vmatpush1.msra.mxu0 0.0
      %1427 = vmatprep.subr.mxu0 0.0
      %1428 = vmatpush1.msra.mxu0 0.0
      %1429 = vmatprep.subr.mxu0 0.0
      %1430 = vmatpush1.msra.mxu0 0.0
      %1431 = vmatprep.subr.mxu0 0.0
      %1432 = vmatpush1.msra.mxu0 0.0
      %1433 = vmatprep.subr.mxu0 0.0
      %1434 = vmatpush1.msra.mxu0 0.0
      %1435 = vmatprep.subr.mxu0 0.0
      %1436 = vmatpush1.msra.mxu0 0.0
      %1437 = vmatprep.subr.mxu0 0.0
      %1438 = vmatpush1.msra.mxu0 0.0
      %1439 = vmatprep.subr.mxu0 0.0
      %1440 = vmatpush1.msra.mxu0 0.0
      %1441 = vmatprep.mubr.f32.mxu0 0.0
      %1442 = vmatmul.mubr.f32.gmra.mrb[0].mxu0 %v1375
      %v1443 = vpop.f32.mrb[0].mxu0
      %v1444 = vadd.f32 0.0, %v1443
      %v1445 = vpop.f32.mrb[0].mxu0
      %v1446 = vadd.f32 0.0, %v1445
      %1447 = vdwg.mxu0
      %1448 = vmatprep.subr.mxu0 0.0
      %1449 = vmatpush1.msra.mxu0 %v1373
      %1450 = vmatprep.subr.mxu0 0.0
      %1451 = vmatpush1.msra.mxu0 0.0
      %1452 = vmatprep.subr.mxu0 0.0
      %1453 = vmatpush1.msra.mxu0 0.0
      %1454 = vmatprep.subr.mxu0 0.0
      %1455 = vmatpush1.msra.mxu0 0.0
      %1456 = vmatprep.subr.mxu0 0.0
      %1457 = vmatpush1.msra.mxu0 0.0
      %1458 = vmatprep.subr.mxu0 0.0
      %1459 = vmatpush1.msra.mxu0 0.0
      %1460 = vmatprep.subr.mxu0 0.0
      %1461 = vmatpush1.msra.mxu0 0.0
      %1462 = vmatprep.subr.mxu0 0.0
      %1463 = vmatpush1.msra.mxu0 0.0
      %1464 = vmatprep.subr.mxu0 0.0
      %1465 = vmatpush1.msra.mxu0 0.0
      %1466 = vmatprep.subr.mxu0 0.0
      %1467 = vmatpush1.msra.mxu0 0.0
      %1468 = vmatprep.subr.mxu0 0.0
      %1469 = vmatpush1.msra.mxu0 0.0
      %1470 = vmatprep.subr.mxu0 0.0
      %1471 = vmatpush1.msra.mxu0 0.0
      %1472 = vmatprep.subr.mxu0 0.0
      %1473 = vmatpush1.msra.mxu0 0.0
      %1474 = vmatprep.subr.mxu0 0.0
      %1475 = vmatpush1.msra.mxu0 0.0
      %1476 = vmatprep.subr.mxu0 0.0
      %1477 = vmatpush1.msra.mxu0 0.0
      %1478 = vmatprep.subr.mxu0 0.0
      %1479 = vmatpush1.msra.mxu0 0.0
      %1480 = vmatprep.subr.mxu0 0.0
      %1481 = vmatpush1.msra.mxu0 0.0
      %1482 = vmatprep.subr.mxu0 0.0
      %1483 = vmatpush1.msra.mxu0 0.0
      %1484 = vmatprep.subr.mxu0 0.0
      %1485 = vmatpush1.msra.mxu0 0.0
      %1486 = vmatprep.subr.mxu0 0.0
      %1487 = vmatpush1.msra.mxu0 0.0
      %1488 = vmatprep.subr.mxu0 0.0
      %1489 = vmatpush1.msra.mxu0 0.0
      %1490 = vmatprep.subr.mxu0 0.0
      %1491 = vmatpush1.msra.mxu0 0.0
      %1492 = vmatprep.subr.mxu0 0.0
      %1493 = vmatpush1.msra.mxu0 0.0
      %1494 = vmatprep.subr.mxu0 0.0
      %1495 = vmatpush1.msra.mxu0 0.0
      %1496 = vmatprep.subr.mxu0 0.0
      %1497 = vmatpush1.msra.mxu0 0.0
      %1498 = vmatprep.subr.mxu0 0.0
      %1499 = vmatpush1.msra.mxu0 0.0
      %1500 = vmatprep.subr.mxu0 0.0
      %1501 = vmatpush1.msra.mxu0 0.0
      %1502 = vmatprep.subr.mxu0 0.0
      %1503 = vmatpush1.msra.mxu0 0.0
      %1504 = vmatprep.subr.mxu0 0.0
      %1505 = vmatpush1.msra.mxu0 0.0
      %1506 = vmatprep.subr.mxu0 0.0
      %1507 = vmatpush1.msra.mxu0 0.0
      %1508 = vmatprep.subr.mxu0 0.0
      %1509 = vmatpush1.msra.mxu0 0.0
      %1510 = vmatprep.subr.mxu0 0.0
      %1511 = vmatpush1.msra.mxu0 0.0
      %1512 = vmatprep.mubr.f32.mxu0 0.0
      %1513 = vmatmul.mubr.f32.gmra.mrb[0].mxu0 %v1375
      %v1514 = vpop.f32.mrb[0].mxu0
      %v1515 = vadd.f32 0.0, %v1514
      %v1516 = vpop.f32.mrb[0].mxu0
      %1517 = vdwg.mxu0
      %v1518 = vadd.f32 %v1361, %v1444
      %v1519 = vadd.f32 %v1362, %v1446
      %v1520 = vadd.f32 %v1363, %v1515
      %1521 = vrot.lane.b32.xlu0 %v275, 109
      %v1522 = vpop.permute.xlu0 %1521
      %1523 = vrot.lane.b32.xlu0 %v276, 109
      %v1524 = vpop.permute.xlu0 %1523
      %1525 = vrot.lane.b32.xlu0 %v277, 109
      %v1526 = vpop.permute.xlu0 %1525
      %vm1527 = vcmp.lt.s32.totalorder %v285, 109
      %v1528 = vsel %vm1527, %v1524, %v1526
      %v1529 = vsel %vm1527, %v1522, %v1524
      %v1530 = vsel %vm1527, %v1526, %v1522
      %v1532 = vsel %vm300, %v236, 0
      %1534 = vmatprep.subr.mxu0 %v1528
      %1535 = vmatpush1.msra.mxu0 %v1529
      %1536 = vmatprep.subr.mxu0 0.0
      %1537 = vmatpush1.msra.mxu0 0.0
      %1538 = vmatprep.subr.mxu0 0.0
      %1539 = vmatpush1.msra.mxu0 0.0
      %1540 = vmatprep.subr.mxu0 0.0
      %1541 = vmatpush1.msra.mxu0 0.0
      %1542 = vmatprep.subr.mxu0 0.0
      %1543 = vmatpush1.msra.mxu0 0.0
      %1544 = vmatprep.subr.mxu0 0.0
      %1545 = vmatpush1.msra.mxu0 0.0
      %1546 = vmatprep.subr.mxu0 0.0
      %1547 = vmatpush1.msra.mxu0 0.0
      %1548 = vmatprep.subr.mxu0 0.0
      %1549 = vmatpush1.msra.mxu0 0.0
      %1550 = vmatprep.subr.mxu0 0.0
      %1551 = vmatpush1.msra.mxu0 0.0
      %1552 = vmatprep.subr.mxu0 0.0
      %1553 = vmatpush1.msra.mxu0 0.0
      %1554 = vmatprep.subr.mxu0 0.0
      %1555 = vmatpush1.msra.mxu0 0.0
      %1556 = vmatprep.subr.mxu0 0.0
      %1557 = vmatpush1.msra.mxu0 0.0
      %1558 = vmatprep.subr.mxu0 0.0
      %1559 = vmatpush1.msra.mxu0 0.0
      %1560 = vmatprep.subr.mxu0 0.0
      %1561 = vmatpush1.msra.mxu0 0.0
      %1562 = vmatprep.subr.mxu0 0.0
      %1563 = vmatpush1.msra.mxu0 0.0
      %1564 = vmatprep.subr.mxu0 0.0
      %1565 = vmatpush1.msra.mxu0 0.0
      %1566 = vmatprep.subr.mxu0 0.0
      %1567 = vmatpush1.msra.mxu0 0.0
      %1568 = vmatprep.subr.mxu0 0.0
      %1569 = vmatpush1.msra.mxu0 0.0
      %1570 = vmatprep.subr.mxu0 0.0
      %1571 = vmatpush1.msra.mxu0 0.0
      %1572 = vmatprep.subr.mxu0 0.0
      %1573 = vmatpush1.msra.mxu0 0.0
      %1574 = vmatprep.subr.mxu0 0.0
      %1575 = vmatpush1.msra.mxu0 0.0
      %1576 = vmatprep.subr.mxu0 0.0
      %1577 = vmatpush1.msra.mxu0 0.0
      %1578 = vmatprep.subr.mxu0 0.0
      %1579 = vmatpush1.msra.mxu0 0.0
      %1580 = vmatprep.subr.mxu0 0.0
      %1581 = vmatpush1.msra.mxu0 0.0
      %1582 = vmatprep.subr.mxu0 0.0
      %1583 = vmatpush1.msra.mxu0 0.0
      %1584 = vmatprep.subr.mxu0 0.0
      %1585 = vmatpush1.msra.mxu0 0.0
      %1586 = vmatprep.subr.mxu0 0.0
      %1587 = vmatpush1.msra.mxu0 0.0
      %1588 = vmatprep.subr.mxu0 0.0
      %1589 = vmatpush1.msra.mxu0 0.0
      %1590 = vmatprep.subr.mxu0 0.0
      %1591 = vmatpush1.msra.mxu0 0.0
      %1592 = vmatprep.subr.mxu0 0.0
      %1593 = vmatpush1.msra.mxu0 0.0
      %1594 = vmatprep.subr.mxu0 0.0
      %1595 = vmatpush1.msra.mxu0 0.0
      %1596 = vmatprep.subr.mxu0 0.0
      %1597 = vmatpush1.msra.mxu0 0.0
      %1598 = vmatprep.mubr.f32.mxu0 0.0
      %1599 = vmatmul.mubr.f32.gmra.mrb[0].mxu0 %v1532
      %v1600 = vpop.f32.mrb[0].mxu0
      %v1601 = vadd.f32 0.0, %v1600
      %v1602 = vpop.f32.mrb[0].mxu0
      %v1603 = vadd.f32 0.0, %v1602
      %1604 = vdwg.mxu0
      %1605 = vmatprep.subr.mxu0 0.0
      %1606 = vmatpush1.msra.mxu0 %v1530
      %1607 = vmatprep.subr.mxu0 0.0
      %1608 = vmatpush1.msra.mxu0 0.0
      %1609 = vmatprep.subr.mxu0 0.0
      %1610 = vmatpush1.msra.mxu0 0.0
      %1611 = vmatprep.subr.mxu0 0.0
      %1612 = vmatpush1.msra.mxu0 0.0
      %1613 = vmatprep.subr.mxu0 0.0
      %1614 = vmatpush1.msra.mxu0 0.0
      %1615 = vmatprep.subr.mxu0 0.0
      %1616 = vmatpush1.msra.mxu0 0.0
      %1617 = vmatprep.subr.mxu0 0.0
      %1618 = vmatpush1.msra.mxu0 0.0
      %1619 = vmatprep.subr.mxu0 0.0
      %1620 = vmatpush1.msra.mxu0 0.0
      %1621 = vmatprep.subr.mxu0 0.0
      %1622 = vmatpush1.msra.mxu0 0.0
      %1623 = vmatprep.subr.mxu0 0.0
      %1624 = vmatpush1.msra.mxu0 0.0
      %1625 = vmatprep.subr.mxu0 0.0
      %1626 = vmatpush1.msra.mxu0 0.0
      %1627 = vmatprep.subr.mxu0 0.0
      %1628 = vmatpush1.msra.mxu0 0.0
      %1629 = vmatprep.subr.mxu0 0.0
      %1630 = vmatpush1.msra.mxu0 0.0
      %1631 = vmatprep.subr.mxu0 0.0
      %1632 = vmatpush1.msra.mxu0 0.0
      %1633 = vmatprep.subr.mxu0 0.0
      %1634 = vmatpush1.msra.mxu0 0.0
      %1635 = vmatprep.subr.mxu0 0.0
      %1636 = vmatpush1.msra.mxu0 0.0
      %1637 = vmatprep.subr.mxu0 0.0
      %1638 = vmatpush1.msra.mxu0 0.0
      %1639 = vmatprep.subr.mxu0 0.0
      %1640 = vmatpush1.msra.mxu0 0.0
      %1641 = vmatprep.subr.mxu0 0.0
      %1642 = vmatpush1.msra.mxu0 0.0
      %1643 = vmatprep.subr.mxu0 0.0
      %1644 = vmatpush1.msra.mxu0 0.0
      %1645 = vmatprep.subr.mxu0 0.0
      %1646 = vmatpush1.msra.mxu0 0.0
      %1647 = vmatprep.subr.mxu0 0.0
      %1648 = vmatpush1.msra.mxu0 0.0
      %1649 = vmatprep.subr.mxu0 0.0
      %1650 = vmatpush1.msra.mxu0 0.0
      %1651 = vmatprep.subr.mxu0 0.0
      %1652 = vmatpush1.msra.mxu0 0.0
      %1653 = vmatprep.subr.mxu0 0.0
      %1654 = vmatpush1.msra.mxu0 0.0
      %1655 = vmatprep.subr.mxu0 0.0
      %1656 = vmatpush1.msra.mxu0 0.0
      %1657 = vmatprep.subr.mxu0 0.0
      %1658 = vmatpush1.msra.mxu0 0.0
      %1659 = vmatprep.subr.mxu0 0.0
      %1660 = vmatpush1.msra.mxu0 0.0
      %1661 = vmatprep.subr.mxu0 0.0
      %1662 = vmatpush1.msra.mxu0 0.0
      %1663 = vmatprep.subr.mxu0 0.0
      %1664 = vmatpush1.msra.mxu0 0.0
      %1665 = vmatprep.subr.mxu0 0.0
      %1666 = vmatpush1.msra.mxu0 0.0
      %1667 = vmatprep.subr.mxu0 0.0
      %1668 = vmatpush1.msra.mxu0 0.0
      %1669 = vmatprep.mubr.f32.mxu0 0.0
      %1670 = vmatmul.mubr.f32.gmra.mrb[0].mxu0 %v1532
      %v1671 = vpop.f32.mrb[0].mxu0
      %v1672 = vadd.f32 0.0, %v1671
      %v1673 = vpop.f32.mrb[0].mxu0
      %1674 = vdwg.mxu0
      %v1675 = vadd.f32 %v1518, %v1601
      %v1676 = vadd.f32 %v1519, %v1603
      %v1677 = vadd.f32 %v1520, %v1672
      %1678 = vst [vmem:[%s224] sm:$0xff] %v1675
      %1679 = vst [vmem:[%s224 + $0x8] sm:$0xff] %v1676
      %1680 = vst [vmem:[%s224 + $0x10] sm:$0xff] %v1677
      %p1681 = scmp.lt.s32.totalorder %s16, 1
      %s1682 = scalar_select %p1681, %s16, 1
      %s1683 = smul.addr %s1682, 3
      %s1684 = smul.addr %s1683, 8
      %s1685 = scalar_lea.vmem %s5, %s1684
      // Predicated region
      $region41: #{bn_relu_conv.1} parent=39 // pred_check
        %p1686 = pneg %p144
      $region42: #{bn_relu_conv.1} parent=39 // pred_check_branch
        %1688 = sbr.rel (%p1686) target = $region44
      $region43: #{bn_relu_conv.1} parent=39 // pred_region
        _
      $region44: #{bn_relu_conv.1} parent=39 // pred_fallthru
        _
    $region40: #{bn_relu_conv.1} parent=5 // pred_fallthru
      _
    %p1689 = scmp.le.s32.totalorder 2, %s11
    // Predicated region
    $region45: #{bn_relu_conv.1} parent=5 // pred_check
      %p1690 = pneg %p1689
    $region46: #{bn_relu_conv.1} parent=5 // pred_check_branch
      %1692 = sbr.rel (%p1690) target = $region48
    $region47: #{bn_relu_conv.1} parent=5 // pred_region
      %s1693 = ssub.s32 %s11, 2
      // Predicated region
      $region49: #{bn_relu_conv.1} parent=47 // pred_check
        %p1694 = pneg %p150
      $region50: #{bn_relu_conv.1} parent=47 // pred_check_branch
        %1696 = sbr.rel (%p1694) target = $region52
      $region51: #{bn_relu_conv.1} parent=47 // pred_region
        %p1697 = scmp.lt.s32.totalorder %s17, 1
        %s1698 = scalar_select %p1697, %s17, 1
        %s1699 = smul.addr %s1698, 3
        %s1700 = smul.addr %s1699, 8
        %s1701 = scalar_lea.vmem %s5, %s1700
      $region52: #{bn_relu_conv.1} parent=47 // pred_fallthru
        _
    $region48: #{bn_relu_conv.1} parent=5 // pred_fallthru
      _
  $region6: #{bn_relu_conv.1} parent=0 // loop_footer
    %s15 = sadd.s32 1, %s11
  $region7: #{bn_relu_conv.1} parent=0 // loop_footer_branch
    %10 = sbr.rel target = $region3
  $region8: #{bn_relu_conv.1} parent=0 // loop_exit
    _

</llo_original>
